<compile_context>
chip_gen: v5e
topology: v5e:2x2
jax: 0.10.0
libtpu: 0.0.40
codegen_flags: <defaults>
</compile_context>

<pallas_src>
import functools

import jax
import jax.numpy as jnp
from jax import lax
from jax.experimental import pallas as pl
from jax.experimental.pallas import tpu as pltpu

_BN_EPS = 1e-5
_BASIC_EXPANSION = 1  # nn.BasicBlock.expansion


def _round_up(x, m):
    return ((x + m - 1) // m) * m


def _vmem_limit_bytes():
    # Generation-safe scoped-VMEM budget: 32 MiB works on v5e/v6e (128 MiB
    # physical) and v7x (64 MiB physical).
    try:
        cap = pltpu.get_tpu_info().vmem_capacity_bytes
        return int(min(cap // 2, 32 * 1024 * 1024))
    except Exception:
        return 32 * 1024 * 1024


_VMEM_LIMIT = _vmem_limit_bytes()
# Live-tile budget: conservative so the same tiling is safe on v7x (64 MiB VMEM).
_TILE_BUDGET = 20 * 1024 * 1024


def _tile_bytes(tm, tk, c_pad):
    a = 2 * tm * tk * 2          # bf16 A tile, double buffered
    w = 2 * tk * c_pad * 2       # bf16 W tile (assume double buffered)
    acc = tm * c_pad * 4         # f32 accumulator scratch
    y = 2 * tm * c_pad * 2       # bf16 output tile, double buffered
    st = 4 * 2 * c_pad * 4       # stats tiles
    return a + w + acc + y + st


def _pick_tiles(m, k_pad, c_pad):
    """Choose (tm, tk): prefer the whole K resident (weight DMA'd once, single
    reduction step) and at least 2 M tiles (v7x megacore), under a v7x-safe
    VMEM budget.  tm is a multiple of 16 (bf16 sublane packing)."""
    m16 = _round_up(m, 16)
    cands = [t for t in (2048, 1024, 512, 256, 128, 64, 32, 16) if t <= m16]
    if not cands:
        cands = [m16]
    pref = [t for t in cands if _round_up(m, t) // t >= 2] or cands

    def tk_for(tm):
        if _tile_bytes(tm, k_pad, c_pad) <= _TILE_BUDGET:
            return k_pad                              # full K resident
        for cand in (2048, 1024, 512, 256, 128):
            if k_pad % cand == 0 and _tile_bytes(tm, cand, c_pad) <= _TILE_BUDGET:
                return cand
        return 128

    for tm in pref:
        tk = tk_for(tm)
        if _tile_bytes(tm, tk, c_pad) <= _TILE_BUDGET:
            return tm, tk
    return cands[-1], 128


# ---------------------------------------------------------------------------
# Pallas kernels
# ---------------------------------------------------------------------------
def _matmul_stats_kernel(x_ref, w_ref, y_ref, s_ref, acc_ref):
    """Tiled matmul (bf16 operands, f32 VMEM scratch accumulator) that emits a
    bf16 output tile plus per-M-tile BN partial stats on the last K step."""
    k = pl.program_id(1)

    @pl.when(k == 0)
    def _init():
        acc_ref[...] = jnp.zeros_like(acc_ref)

    acc_ref[...] += jnp.dot(x_ref[...], w_ref[...],
                            preferred_element_type=jnp.float32)

    @pl.when(k == pl.num_programs(1) - 1)
    def _finalize():
        acc = acc_ref[...]
        y_ref[...] = acc.astype(y_ref.dtype)
        # Column sums go to the XLU slot; written as two separate rows (no concat).
        s_ref[0, 0:1, :] = jnp.sum(acc, axis=0, keepdims=True)
        s_ref[0, 1:2, :] = jnp.sum(acc * acc, axis=0, keepdims=True)


def _bn_act_kernel(y_ref, st_ref, g_ref, b_ref, o_ref, *, relu, inv_m):
    """BN (batch stats folded in) + optional ReLU; bf16 in / bf16 out."""
    s = jnp.sum(st_ref[...], axis=0)                       # (2, C)
    mean = s[0:1, :] * inv_m
    var = jnp.maximum(s[1:2, :] * inv_m - mean * mean, 0.0)
    scale = g_ref[...] * lax.rsqrt(var + _BN_EPS)
    shift = b_ref[...] - mean * scale
    out = y_ref[...].astype(jnp.float32) * scale + shift
    if relu:
        out = jnp.maximum(out, 0.0)
    o_ref[...] = out.astype(o_ref.dtype)


def _bn_act_res_kernel(y_ref, st_ref, g_ref, b_ref, r_ref, o_ref, *, relu, inv_m):
    s = jnp.sum(st_ref[...], axis=0)
    mean = s[0:1, :] * inv_m
    var = jnp.maximum(s[1:2, :] * inv_m - mean * mean, 0.0)
    scale = g_ref[...] * lax.rsqrt(var + _BN_EPS)
    shift = b_ref[...] - mean * scale
    out = (y_ref[...].astype(jnp.float32) * scale + shift
           + r_ref[...].astype(jnp.float32))
    if relu:
        out = jnp.maximum(out, 0.0)
    o_ref[...] = out.astype(o_ref.dtype)


def _maxpool_kernel(p00_ref, p01_ref, p10_ref, p11_ref, o_ref):
    """3x3 s2 max pool: the 9 taps are contiguous windows of 4 parity planes."""
    planes = ((p00_ref, p01_ref), (p10_ref, p11_ref))
    ho, wo = o_ref.shape[1], o_ref.shape[2]
    res = None
    for i in range(3):
        for j in range(3):
            v = planes[i % 2][j % 2][0, pl.ds(i // 2, ho), pl.ds(j // 2, wo), :]
            res = v if res is None else jnp.maximum(res, v)
    o_ref[0] = res


def _head_kernel(x_ref, w_ref, b_ref, o_ref):
    # x: [N, H*W, C] bf16 -> adaptive avg pool (1,1), flatten, Linear (f32).
    pooled = jnp.mean(x_ref[...].astype(jnp.float32), axis=1)      # [N, C]
    o_ref[...] = jnp.dot(pooled, w_ref[...],
                         preferred_element_type=jnp.float32) + b_ref[...]


# ---------------------------------------------------------------------------
# Conv + BN (+ residual) (+ ReLU): exactly two tiled pallas_calls
# ---------------------------------------------------------------------------
def _conv_bn_matmul(patches, w_flat, gamma, beta, residual=None, relu=True):
    """patches: [M, K_pad] bf16, w_flat: [K_pad, C_pad] bf16,
    gamma/beta: [C_pad] f32, residual: [M, C_pad] (any float) or None.
    Returns [M, C_pad] bf16."""
    m, k_pad = patches.shape
    c_pad = w_flat.shape[1]
    tm, tk = _pick_tiles(m, k_pad, c_pad)
    m_pad = _round_up(m, tm)
    mt, kt = m_pad // tm, k_pad // tk

    if m_pad > m:
        patches = jnp.pad(patches, ((0, m_pad - m), (0, 0)))

    flops = 2 * m_pad * k_pad * c_pad
    bytes_acc = (m_pad * k_pad * 2 + k_pad * c_pad * 2
                 + m_pad * c_pad * 2 + mt * 2 * c_pad * 4)

    # Pass 1: tiled matmul (f32 scratch acc) + per-tile sum / sum-of-squares.
    y, stats = pl.pallas_call(
        _matmul_stats_kernel,
        grid=(mt, kt),
        in_specs=[
            pl.BlockSpec((tm, tk), lambda i, k: (i, k)),
            pl.BlockSpec((tk, c_pad), lambda i, k: (k, 0)),
        ],
        out_specs=(
            pl.BlockSpec((tm, c_pad), lambda i, k: (i, 0)),
            pl.BlockSpec((1, 2, c_pad), lambda i, k: (i, 0, 0)),
        ),
        out_shape=(
            jax.ShapeDtypeStruct((m_pad, c_pad), jnp.bfloat16),
            jax.ShapeDtypeStruct((mt, 2, c_pad), jnp.float32),
        ),
        scratch_shapes=[pltpu.VMEM((tm, c_pad), jnp.float32)],
        compiler_params=pltpu.CompilerParams(
            dimension_semantics=("parallel", "arbitrary"),
            vmem_limit_bytes=_VMEM_LIMIT),
        cost_estimate=pl.CostEstimate(flops=flops, transcendentals=0,
                                      bytes_accessed=bytes_acc),
    )(patches, w_flat)

    gamma2 = gamma.reshape(1, c_pad)
    beta2 = beta.reshape(1, c_pad)

    # Pass 2: BN (stats reduced in-kernel) (+ residual) (+ ReLU), bf16 out.
    in_specs = [
        pl.BlockSpec((tm, c_pad), lambda i: (i, 0)),
        pl.BlockSpec((mt, 2, c_pad), lambda i: (0, 0, 0)),
        pl.BlockSpec((1, c_pad), lambda i: (0, 0)),
        pl.BlockSpec((1, c_pad), lambda i: (0, 0)),
    ]
    args = [y, stats, gamma2, beta2]
    if residual is not None:
        res = residual.astype(jnp.bfloat16)
        if m_pad > m:
            res = jnp.pad(res, ((0, m_pad - m), (0, 0)))
        in_specs.append(pl.BlockSpec((tm, c_pad), lambda i: (i, 0)))
        args.append(res)
        kern = functools.partial(_bn_act_res_kernel, relu=relu, inv_m=1.0 / m)
    else:
        kern = functools.partial(_bn_act_kernel, relu=relu, inv_m=1.0 / m)

    out = pl.pallas_call(
        kern,
        grid=(mt,),
        in_specs=in_specs,
        out_specs=pl.BlockSpec((tm, c_pad), lambda i: (i, 0)),
        out_shape=jax.ShapeDtypeStruct((m_pad, c_pad), jnp.bfloat16),
        compiler_params=pltpu.CompilerParams(
            dimension_semantics=("parallel",),
            vmem_limit_bytes=_VMEM_LIMIT),
    )(*args)
    return out[:m]


def _im2col(x, kh, kw, stride, pad):
    """NHWC bf16 -> patches [N*Ho*Wo, kh*kw*C] (plain-JAX gather)."""
    # TODO(synk): fuse this tap gather into the matmul kernel (tap reduction
    #             axis) to avoid the kh*kw x HBM patch materialization.
    n, h, w, c = x.shape
    ho = (h + 2 * pad - kh) // stride + 1
    wo = (w + 2 * pad - kw) // stride + 1
    xp = jnp.pad(x, ((0, 0), (pad, pad), (pad, pad), (0, 0)))
    cols = []
    for i in range(kh):
        for j in range(kw):
            cols.append(xp[:, i:i + stride * (ho - 1) + 1:stride,
                           j:j + stride * (wo - 1) + 1:stride, :])
    patches = jnp.stack(cols, axis=3)                # [N, Ho, Wo, kh*kw, C]
    return patches.reshape(n * ho * wo, kh * kw * c), (n, ho, wo)


@functools.partial(jax.jit, static_argnames=("stride", "pad", "relu"))
def conv_bn(x, w, gamma, beta, *, stride, pad, residual=None, relu=True):
    """x: [N,H,W,C_act] (C_act >= Cin; extra pad channels are dropped here so K
    is not inflated).  w: [kh,kw,Cin,Cout] f32.
    Returns [N,Ho,Wo,Cout_pad] bf16 (Cout_pad = 128*k, pad channels exactly 0)."""
    n, h, wd, c_act = x.shape
    kh, kw, cin, cout = w.shape
    c_pad = _round_up(cout, 128)

    xa = x[..., :cin].astype(jnp.bfloat16)   # drop zero pad channels (halves K)

    if kh == 1 and kw == 1 and pad == 0:
        # 1x1 conv needs no im2col: strided slice + matmul.
        xs = xa[:, ::stride, ::stride, :]
        _, ho, wo, _ = xs.shape
        patches = xs.reshape(n * ho * wo, cin)
    else:
        patches, (_, ho, wo) = _im2col(xa, kh, kw, stride, pad)

    k = patches.shape[1]
    k_pad = _round_up(k, 128)
    if k_pad > k:
        patches = jnp.pad(patches, ((0, 0), (0, k_pad - k)))

    # Weight: pad Cout to a lane-dense multiple of 128, flatten, pad K, cast bf16.
    wf = jnp.pad(w, ((0, 0), (0, 0), (0, 0), (0, c_pad - cout)))
    w_flat = wf.reshape(kh * kw * cin, c_pad)
    if k_pad > w_flat.shape[0]:
        w_flat = jnp.pad(w_flat, ((0, k_pad - w_flat.shape[0]), (0, 0)))
    w_flat = w_flat.astype(jnp.bfloat16)

    g = jnp.pad(gamma, (0, c_pad - cout))
    b = jnp.pad(beta, (0, c_pad - cout))

    res2d = None
    if residual is not None:
        res2d = residual.reshape(-1, residual.shape[-1])

    out2d = _conv_bn_matmul(patches, w_flat, g, b, residual=res2d, relu=relu)
    return out2d.reshape(n, ho, wo, c_pad)


# ---------------------------------------------------------------------------
# MaxPool 3x3 / stride 2 / pad 1  (direct parity-plane reads, bf16)
# ---------------------------------------------------------------------------
@jax.jit
def maxpool_3x3_s2(x):
    n, h, w, c = x.shape
    ho = (h + 2 - 3) // 2 + 1
    wo = (w + 2 - 3) // 2 + 1
    hp, wp = 2 * (ho + 1), 2 * (wo + 1)
    neg = float(jnp.finfo(jnp.bfloat16).min)
    xp = jnp.pad(x.astype(jnp.bfloat16),
                 ((0, 0), (1, hp - 1 - h), (1, wp - 1 - w), (0, 0)),
                 constant_values=neg)
    # One transpose into 4 parity planes: plane(i,j)[n,a,b,:] = xp[n,2a+i,2b+j,:].
    xv = xp.reshape(n, ho + 1, 2, wo + 1, 2, c)
    planes = [xv[:, :, i, :, j, :] for i in range(2) for j in range(2)]

    return pl.pallas_call(
        _maxpool_kernel,
        grid=(n,),
        in_specs=[pl.BlockSpec((1, ho + 1, wo + 1, c),
                               lambda b: (b, 0, 0, 0))] * 4,
        out_specs=pl.BlockSpec((1, ho, wo, c), lambda b: (b, 0, 0, 0)),
        out_shape=jax.ShapeDtypeStruct((n, ho, wo, c), jnp.bfloat16),
        compiler_params=pltpu.CompilerParams(
            dimension_semantics=("parallel",),
            vmem_limit_bytes=_VMEM_LIMIT),
    )(*planes)


# ---------------------------------------------------------------------------
# AvgPool(1,1) + flatten + Linear head (output padded to 128 lanes)
# ---------------------------------------------------------------------------
@jax.jit
def avgpool_fc(x, fc_w, fc_b):
    n, h, w, c = x.shape
    xf = x.reshape(n, h * w, c)
    nc = fc_w.shape[1]
    nc_pad = _round_up(nc, 128)
    wp = jnp.pad(fc_w, ((0, 0), (0, nc_pad - nc)))
    bp = jnp.pad(fc_b, (0, nc_pad - nc)).reshape(1, nc_pad)
    out = pl.pallas_call(
        _head_kernel,
        out_shape=jax.ShapeDtypeStruct((n, nc_pad), jnp.float32),
        in_specs=[pl.BlockSpec(memory_space=pltpu.MemorySpace.VMEM)] * 3,
        out_specs=pl.BlockSpec(memory_space=pltpu.MemorySpace.VMEM),
        compiler_params=pltpu.CompilerParams(vmem_limit_bytes=_VMEM_LIMIT),
    )(xf, wp, bp)
    return out[:, :nc]


# ---------------------------------------------------------------------------
# Parameters (deterministic synthetic init; mirrors nn.Module __init__ shapes)
# ---------------------------------------------------------------------------
def _conv_w(key, kh, kw, cin, cout):
    fan_in = kh * kw * cin
    std = (2.0 / fan_in) ** 0.5
    return jax.random.normal(key, (kh, kw, cin, cout), jnp.float32) * std


def init_resnet_params(key, block_num, num_classes=1000):
    params = {}
    key, k = jax.random.split(key)
    params["stem_w"] = _conv_w(k, 7, 7, 3, 64)            # conv1: 7x7 s2 p3, no bias
    params["stem_g"] = jnp.ones((64,), jnp.float32)       # bn1 gamma
    params["stem_b"] = jnp.zeros((64,), jnp.float32)      # bn1 beta

    in_channel = 64
    layers = []
    for channel, n_blocks, stride in zip((64, 128, 256, 512), block_num,
                                         (1, 2, 2, 2)):
        blocks = []
        for bi in range(n_blocks):
            blk_stride = stride if bi == 0 else 1
            blk = {"stride": blk_stride}
            # Downsample condition exactly as written in __make_layer
            # (compares in_channel against block.expansion, as in the reference).
            if bi == 0 and (stride != 1 or in_channel != _BASIC_EXPANSION):
                key, k = jax.random.split(key)
                cds = channel * _BASIC_EXPANSION
                blk["ds_w"] = _conv_w(k, 1, 1, in_channel, cds)
                blk["ds_g"] = jnp.ones((cds,), jnp.float32)
                blk["ds_b"] = jnp.zeros((cds,), jnp.float32)
            key, k1, k2 = jax.random.split(key, 3)
            blk["w1"] = _conv_w(k1, 3, 3, in_channel, channel)   # 3x3 s=blk_stride p1
            blk["g1"] = jnp.ones((channel,), jnp.float32)
            blk["b1"] = jnp.zeros((channel,), jnp.float32)
            blk["w2"] = _conv_w(k2, 3, 3, channel, channel)      # 3x3 s1 p1
            blk["g2"] = jnp.ones((channel,), jnp.float32)
            blk["b2"] = jnp.zeros((channel,), jnp.float32)
            blocks.append(blk)
            in_channel = channel * _BASIC_EXPANSION
        layers.append(blocks)
    params["layers"] = layers

    key, k = jax.random.split(key)
    params["fc_w"] = jax.random.normal(
        k, (512 * _BASIC_EXPANSION, num_classes), jnp.float32) / (512.0 ** 0.5)
    params["fc_b"] = jnp.zeros((num_classes,), jnp.float32)
    return params


# ---------------------------------------------------------------------------
# Forward pass
# ---------------------------------------------------------------------------
def basic_block_forward(x, blk):
    stride = blk["stride"]
    if "ds_w" in blk:
        identity = conv_bn(x, blk["ds_w"], blk["ds_g"], blk["ds_b"],
                           stride=stride, pad=0, relu=False)
    else:
        identity = x

    out = conv_bn(x, blk["w1"], blk["g1"], blk["b1"],
                  stride=stride, pad=1, relu=True)
    out = conv_bn(out, blk["w2"], blk["g2"], blk["b2"],
                  stride=1, pad=1, residual=identity, relu=True)
    return out


def resnet_forward(x_nchw, params):
    # Accept PyTorch-style NCHW input, convert once to NHWC.
    x = jnp.transpose(x_nchw, (0, 2, 3, 1)).astype(jnp.float32)

    # stem: conv7x7 s2 p3 -> bn -> relu (output channels padded 64 -> 128, bf16)
    x = conv_bn(x, params["stem_w"], params["stem_g"], params["stem_b"],
                stride=2, pad=3, relu=True)

    # maxpool 3x3 s2 p1 (bf16, direct parity-plane reads)
    x = maxpool_3x3_s2(x)

    # residual layers (padded zero-channels stay exactly zero; convs slice them off)
    for blocks in params["layers"]:
        for blk in blocks:
            x = basic_block_forward(x, blk)

    # adaptive avg pool (1,1) + flatten + fc (final C = 512, no padding to drop)
    x = x[..., : params["fc_w"].shape[0]]
    return avgpool_fc(x, params["fc_w"], params["fc_b"])


if __name__ == "__main__":
    key = jax.random.PRNGKey(0)
    k_params, k_x = jax.random.split(key)

    block_num = (1, 1, 1, 1)   # small BasicBlock ResNet
    num_classes = 10
    params = init_resnet_params(k_params, block_num, num_classes=num_classes)

    # NCHW input, like the PyTorch module expects.
    x = jax.random.normal(k_x, (2, 3, 32, 32), jnp.float32)

    out = resnet_forward(x, params)
    out = jax.block_until_ready(out)

    assert out.shape == (2, num_classes), out.shape
    assert bool(jnp.all(jnp.isfinite(out)))
    print("KERNEL_OK")
</pallas_src>

<mosaic_0001>
module attributes {stable_mosaic.version = 11 : i64} {
  func.func @_matmul_stats_kernel(%arg0: i32, %arg1: i32, %arg2: memref<256x256xbf16, #tpu.memory_space<vmem>>, %arg3: memref<256x128xbf16, #tpu.memory_space<vmem>>, %arg4: memref<256x128xbf16, #tpu.memory_space<vmem>>, %arg5: memref<1x2x128xf32, #tpu.memory_space<vmem>>, %arg6: memref<256x128xf32, #tpu.memory_space<vmem>>) attributes {dimension_semantics = [#tpu.dimension_semantics<parallel>, #tpu.dimension_semantics<arbitrary>], iteration_bounds = array<i64: 2, 1>, scalar_prefetch = 0 : i64, scratch_operands = 1 : i64, tpu.core_type = #tpu.core_type<tc>, window_params = [{transform_indices = @transform_0, window_bounds = array<i64: 256, 256>}, {transform_indices = @transform_1, window_bounds = array<i64: 256, 128>}, {transform_indices = @transform_2, window_bounds = array<i64: 256, 128>}, {transform_indices = @transform_3, window_bounds = array<i64: 1, 2, 128>}]} {
    %c0_i32 = arith.constant 0 : i32
    %0 = arith.cmpi eq, %arg1, %c0_i32 : i32
    %1 = arith.extui %0 : i1 to i32
    %c0_i32_0 = arith.constant 0 : i32
    %2 = arith.cmpi ne, %1, %c0_i32_0 : i32
    scf.if %2 {
      %cst_10 = arith.constant 0.000000e+00 : f32
      %12 = vector.broadcast %cst_10 : f32 to vector<256x128xf32>
      %c0_11 = arith.constant 0 : index
      %c0_12 = arith.constant 0 : index
      %13 = vector.load %arg6[%c0_11, %c0_12] : memref<256x128xf32, #tpu.memory_space<vmem>>, vector<256x128xf32>
      tpu.vector_store %arg6[%c0_11, %c0_12], %12 {strides = array<i32>} : memref<256x128xf32, #tpu.memory_space<vmem>>, vector<256x128xf32>,
    } else {
    }
    %c0 = arith.constant 0 : index
    %c0_1 = arith.constant 0 : index
    %3 = vector.load %arg6[%c0, %c0_1] : memref<256x128xf32, #tpu.memory_space<vmem>>, vector<256x128xf32>
    %c0_2 = arith.constant 0 : index
    %c0_3 = arith.constant 0 : index
    %4 = vector.load %arg2[%c0_2, %c0_3] : memref<256x256xbf16, #tpu.memory_space<vmem>>, vector<256x256xbf16>
    %c0_4 = arith.constant 0 : index
    %c0_5 = arith.constant 0 : index
    %5 = vector.load %arg3[%c0_4, %c0_5] : memref<256x128xbf16, #tpu.memory_space<vmem>>, vector<256x128xbf16>
    %cst = arith.constant dense<0.000000e+00> : vector<256x128xf32>
    %6 = tpu.matmul %4, %5, %cst {dimension_numbers = #tpu.dot_dimension_numbers<[1], [0], [0], [1], [0, 0, 1, 1], [], []>} : vector<256x256xbf16>, vector<256x128xbf16>, vector<256x128xf32> -> vector<256x128xf32>
    %7 = arith.addf %3, %6 : vector<256x128xf32>
    %c0_6 = arith.constant 0 : index
    %c0_7 = arith.constant 0 : index
    %8 = vector.load %arg6[%c0_6, %c0_7] : memref<256x128xf32, #tpu.memory_space<vmem>>, vector<256x128xf32>
    tpu.vector_store %arg6[%c0_6, %c0_7], %7 {strides = array<i32>} : memref<256x128xf32, #tpu.memory_space<vmem>>, vector<256x128xf32>,
    %c0_i32_8 = arith.constant 0 : i32
    %9 = arith.cmpi eq, %arg1, %c0_i32_8 : i32
    %10 = arith.extui %9 : i1 to i32
    %c0_i32_9 = arith.constant 0 : i32
    %11 = arith.cmpi ne, %10, %c0_i32_9 : i32
    scf.if %11 {
      %c0_10 = arith.constant 0 : index
      %c0_11 = arith.constant 0 : index
      %12 = vector.load %arg6[%c0_10, %c0_11] : memref<256x128xf32, #tpu.memory_space<vmem>>, vector<256x128xf32>
      %13 = arith.truncf %12 : vector<256x128xf32> to vector<256x128xbf16>
      %c0_12 = arith.constant 0 : index
      %c0_13 = arith.constant 0 : index
      %14 = vector.load %arg4[%c0_12, %c0_13] : memref<256x128xbf16, #tpu.memory_space<vmem>>, vector<256x128xbf16>
      tpu.vector_store %arg4[%c0_12, %c0_13], %13 {strides = array<i32>} : memref<256x128xbf16, #tpu.memory_space<vmem>>, vector<256x128xbf16>,
      %cst_14 = arith.constant dense<0.000000e+00> : vector<128xf32>
      %15 = vector.multi_reduction <add>, %12, %cst_14 [0] : vector<256x128xf32> to vector<128xf32>
      %16 = vector.shape_cast %15 : vector<128xf32> to vector<1x128xf32>
      %c0_15 = arith.constant 0 : index
      %c0_16 = arith.constant 0 : index
      %c0_17 = arith.constant 0 : index
      %17 = vector.load %arg5[%c0_15, %c0_16, %c0_17] : memref<1x2x128xf32, #tpu.memory_space<vmem>>, vector<1x1x128xf32>
      %18 = vector.shape_cast %17 : vector<1x1x128xf32> to vector<1x128xf32>
      %19 = vector.shape_cast %16 : vector<1x128xf32> to vector<1x1x128xf32>
      tpu.vector_store %arg5[%c0_15, %c0_16, %c0_17], %19 {strides = array<i32>} : memref<1x2x128xf32, #tpu.memory_space<vmem>>, vector<1x1x128xf32>,
      %20 = arith.mulf %12, %12 : vector<256x128xf32>
      %cst_18 = arith.constant dense<0.000000e+00> : vector<128xf32>
      %21 = vector.multi_reduction <add>, %20, %cst_18 [0] : vector<256x128xf32> to vector<128xf32>
      %22 = vector.shape_cast %21 : vector<128xf32> to vector<1x128xf32>
      %c0_19 = arith.constant 0 : index
      %c1 = arith.constant 1 : index
      %c0_20 = arith.constant 0 : index
      %23 = vector.load %arg5[%c0_19, %c1, %c0_20] : memref<1x2x128xf32, #tpu.memory_space<vmem>>, vector<1x1x128xf32>
      %24 = vector.shape_cast %23 : vector<1x1x128xf32> to vector<1x128xf32>
      %25 = vector.shape_cast %22 : vector<1x128xf32> to vector<1x1x128xf32>
      tpu.vector_store %arg5[%c0_19, %c1, %c0_20], %25 {strides = array<i32>} : memref<1x2x128xf32, #tpu.memory_space<vmem>>, vector<1x1x128xf32>,
    } else {
    }
    return
  }
  func.func @transform_0(%arg0: i32, %arg1: i32) -> (i32, i32) {
    %c0_i32 = arith.constant 0 : i32
    return %arg0, %arg1 : i32, i32
  }
  func.func @transform_1(%arg0: i32, %arg1: i32) -> (i32, i32) {
    %c0_i32 = arith.constant 0 : i32
    %c0_i32_0 = arith.constant 0 : i32
    return %arg1, %c0_i32 : i32, i32
  }
  func.func @transform_2(%arg0: i32, %arg1: i32) -> (i32, i32) {
    %c0_i32 = arith.constant 0 : i32
    %c0_i32_0 = arith.constant 0 : i32
    return %arg0, %c0_i32 : i32, i32
  }
  func.func @transform_3(%arg0: i32, %arg1: i32) -> (i32, i32, i32) {
    %c0_i32 = arith.constant 0 : i32
    %c0_i32_0 = arith.constant 0 : i32
    %c0_i32_1 = arith.constant 0 : i32
    return %arg0, %c0_i32, %c0_i32_0 : i32, i32, i32
  }
}

module attributes {stable_mosaic.version = 11 : i64} {
  func.func @_bn_act_kernel(%arg0: i32, %arg1: memref<256x128xbf16, #tpu.memory_space<vmem>>, %arg2: memref<2x2x128xf32, #tpu.memory_space<vmem>>, %arg3: memref<1x128xf32, #tpu.memory_space<vmem>>, %arg4: memref<1x128xf32, #tpu.memory_space<vmem>>, %arg5: memref<256x128xbf16, #tpu.memory_space<vmem>>) attributes {dimension_semantics = [#tpu.dimension_semantics<parallel>], iteration_bounds = array<i64: 2>, scalar_prefetch = 0 : i64, scratch_operands = 0 : i64, tpu.core_type = #tpu.core_type<tc>, window_params = [{transform_indices = @transform_0, window_bounds = array<i64: 256, 128>}, {pipeline_mode = #tpu.pipeline_mode<synchronous>, transform_indices = @transform_1, window_bounds = array<i64: 2, 2, 128>}, {pipeline_mode = #tpu.pipeline_mode<synchronous>, transform_indices = @transform_2, window_bounds = array<i64: 1, 128>}, {pipeline_mode = #tpu.pipeline_mode<synchronous>, transform_indices = @transform_3, window_bounds = array<i64: 1, 128>}, {transform_indices = @transform_4, window_bounds = array<i64: 256, 128>}]} {
    %c0 = arith.constant 0 : index
    %c0_0 = arith.constant 0 : index
    %c0_1 = arith.constant 0 : index
    %0 = vector.load %arg2[%c0, %c0_0, %c0_1] : memref<2x2x128xf32, #tpu.memory_space<vmem>>, vector<2x2x128xf32>
    %cst = arith.constant dense<0.000000e+00> : vector<2x128xf32>
    %1 = vector.multi_reduction <add>, %0, %cst [0] : vector<2x2x128xf32> to vector<2x128xf32>
    %2 = vector.extract_strided_slice %1 {offsets = [0, 0], sizes = [1, 128], strides = [1, 1]} : vector<2x128xf32> to vector<1x128xf32>
    %cst_2 = arith.constant 0.001953125 : f32
    %3 = vector.broadcast %cst_2 : f32 to vector<1x128xf32>
    %4 = arith.mulf %2, %3 : vector<1x128xf32>
    %5 = vector.extract_strided_slice %1 {offsets = [1, 0], sizes = [1, 128], strides = [1, 1]} : vector<2x128xf32> to vector<1x128xf32>
    %cst_3 = arith.constant 0.001953125 : f32
    %6 = vector.broadcast %cst_3 : f32 to vector<1x128xf32>
    %7 = arith.mulf %5, %6 : vector<1x128xf32>
    %8 = arith.mulf %4, %4 : vector<1x128xf32>
    %9 = arith.subf %7, %8 : vector<1x128xf32>
    %cst_4 = arith.constant 0.000000e+00 : f32
    %10 = vector.broadcast %cst_4 : f32 to vector<1x128xf32>
    %11 = arith.maximumf %9, %10 : vector<1x128xf32>
    %c0_5 = arith.constant 0 : index
    %c0_6 = arith.constant 0 : index
    %12 = vector.load %arg3[%c0_5, %c0_6] : memref<1x128xf32, #tpu.memory_space<vmem>>, vector<1x128xf32>
    %cst_7 = arith.constant 9.99999974E-6 : f32
    %13 = vector.broadcast %cst_7 : f32 to vector<1x128xf32>
    %14 = arith.addf %11, %13 : vector<1x128xf32>
    %15 = math.rsqrt %14 : vector<1x128xf32>
    %16 = arith.mulf %12, %15 : vector<1x128xf32>
    %c0_8 = arith.constant 0 : index
    %c0_9 = arith.constant 0 : index
    %17 = vector.load %arg4[%c0_8, %c0_9] : memref<1x128xf32, #tpu.memory_space<vmem>>, vector<1x128xf32>
    %18 = arith.mulf %4, %16 : vector<1x128xf32>
    %19 = arith.subf %17, %18 : vector<1x128xf32>
    %c0_10 = arith.constant 0 : index
    %c0_11 = arith.constant 0 : index
    %20 = vector.load %arg1[%c0_10, %c0_11] : memref<256x128xbf16, #tpu.memory_space<vmem>>, vector<256x128xbf16>
    %21 = arith.extf %20 : vector<256x128xbf16> to vector<256x128xf32>
    %22 = vector.broadcast %16 : vector<1x128xf32> to vector<256x128xf32>
    %23 = arith.mulf %21, %22 : vector<256x128xf32>
    %24 = vector.broadcast %19 : vector<1x128xf32> to vector<256x128xf32>
    %25 = arith.addf %23, %24 : vector<256x128xf32>
    %cst_12 = arith.constant 0.000000e+00 : f32
    %26 = vector.broadcast %cst_12 : f32 to vector<256x128xf32>
    %27 = arith.maximumf %25, %26 : vector<256x128xf32>
    %28 = arith.truncf %27 : vector<256x128xf32> to vector<256x128xbf16>
    %c0_13 = arith.constant 0 : index
    %c0_14 = arith.constant 0 : index
    %29 = vector.load %arg5[%c0_13, %c0_14] : memref<256x128xbf16, #tpu.memory_space<vmem>>, vector<256x128xbf16>
    tpu.vector_store %arg5[%c0_13, %c0_14], %28 {strides = array<i32>} : memref<256x128xbf16, #tpu.memory_space<vmem>>, vector<256x128xbf16>,
    return
  }
  func.func @transform_0(%arg0: i32) -> (i32, i32) {
    %c0_i32 = arith.constant 0 : i32
    %c0_i32_0 = arith.constant 0 : i32
    return %arg0, %c0_i32 : i32, i32
  }
  func.func @transform_1(%arg0: i32) -> (i32, i32, i32) {
    %c0_i32 = arith.constant 0 : i32
    %c0_i32_0 = arith.constant 0 : i32
    %c0_i32_1 = arith.constant 0 : i32
    %c0_i32_2 = arith.constant 0 : i32
    return %c0_i32, %c0_i32_0, %c0_i32_1 : i32, i32, i32
  }
  func.func @transform_2(%arg0: i32) -> (i32, i32) {
    %c0_i32 = arith.constant 0 : i32
    %c0_i32_0 = arith.constant 0 : i32
    %c0_i32_1 = arith.constant 0 : i32
    return %c0_i32, %c0_i32_0 : i32, i32
  }
  func.func @transform_3(%arg0: i32) -> (i32, i32) {
    %c0_i32 = arith.constant 0 : i32
    %c0_i32_0 = arith.constant 0 : i32
    %c0_i32_1 = arith.constant 0 : i32
    return %c0_i32, %c0_i32_0 : i32, i32
  }
  func.func @transform_4(%arg0: i32) -> (i32, i32) {
    %c0_i32 = arith.constant 0 : i32
    %c0_i32_0 = arith.constant 0 : i32
    return %arg0, %c0_i32 : i32, i32
  }
}

</mosaic_0001>

<llo_original>
// kernel: conv_bn.3
$region0: #{conv_bn.3}
  #allocation0 [shape = 'u32[]', space=smem, size = 0x4, offset = 0x4, fixed_abs, tag = 'smem constant byte address 0x4 - core index']
  #allocation1 [shape = 'u32[72,128]{1,0:T(1,128)}', space=vmem, size = 0x9000, scoped, tag = 'internal scratch']
  %s0 = inlined_call_operand.vmem [shape: bf16[512,128], index: 0, kind: input, shape index: {}]
  %s1 = inlined_call_operand.vmem [shape: f32[2,2,128], index: 1, kind: input, shape index: {}]
  %s2 = inlined_call_operand.vmem [shape: f32[1,128], index: 2, kind: input, shape index: {}]
  %s3 = inlined_call_operand.vmem [shape: f32[1,128], index: 3, kind: input, shape index: {}]
  %s4 = inlined_call_operand.hbm [shape: bf16[512,128], index: 4, kind: output, shape index: {}]
  %s5 = sld [smem:[#allocation0]]
  $region49: #{conv_bn.3} parent=0
    _
  %s7 = ssub.s32 1, %s5
  %s8 = scalar_select 0, %s7, %s5
  $region1: #{conv_bn.3} parent=0
    #allocation2 [shape = 'u8[131072]{0}', space=vmem, size = 0x20000, scoped, tag = 'output window, operand 0']
    #allocation3 [shape = 's32[2]{0}', space=sflag, size = 0x8, scoped, tag = 'scoped memory for conv_bn.3']
    %9 = vsyncpa [#allocation3], 0
    %s10 = scalar_lea.sflag [#allocation3], 1
    %11 = vsyncpa %s10, 0
    loop: start=0, step=1, limit=4
    $region2: #{conv_bn.3} parent=1 // loop_pre_header
      _
    $region3: #{conv_bn.3} parent=1 // loop_header
      %s13 = sphi 0, %s17
      %p14 = scmp.ge.s32.totalorder %s13, 4
      %s23 = sphi 0, %s25
      %s26 = sphi 0, %s23
      %s27 = sphi 0, %s26
      %s43 = sphi 0, %s27
      %s47 = sphi 0, %s47
      %s49 = sphi 0, %s47
      %s50 = sphi 0, %s49
      %s64 = sphi 0, %s50
      %s68 = sphi 0, %s68
      %s70 = sphi 0, %s68
      %s71 = sphi 0, %s70
      %s85 = sphi 0, %s71
      %s89 = sphi 0, %s89
      %s91 = sphi 0, %s89
      %s92 = sphi 0, %s91
      %s106 = sphi 0, %s92
      %s112 = sphi 0, %s114
      %s115 = sphi 0, %s112
      %s116 = sphi 0, %s115
      %s132 = sphi 0, %s116
    $region4: #{conv_bn.3} parent=1 // loop_header_branch
      %16 = sbr.rel (%p14) target = $region8
    $region5: #{conv_bn.3} parent=1 // loop_body
      %s18 = ssub.s32 %s13, 1
      %s19 = ssub.s32 %s13, 2
      %s20 = sadd.s32 %s13, 1
      %s21 = ssub.s32 %s13, %s20
      %p22 = scmp.eq.s32.totalorder %s21, 0
      %s24 = sadd.s32 %s23, 1
      %s25 = scalar_select %p22, %s23, %s24
      %p28 = pneg %p22
      %p29 = scmp.eq.s32.totalorder %s13, 1
      %p30 = por %p28, %p29
      %p31 = scmp.ne.s32.totalorder %s23, %s26
      %p32 = scmp.eq.s32.totalorder %s13, 0
      %p33 = por %p31, %p32
      %p34 = scmp.ne.s32.totalorder %s23, %s26
      %p35 = scmp.eq.s32.totalorder %s18, 1
      %p36 = por %p34, %p35
      %p37 = scmp.ne.s32.totalorder %s26, %s27
      %p38 = scmp.eq.s32.totalorder %s18, 0
      %p39 = por %p37, %p38
      %p40 = scmp.ne.s32.totalorder %s26, %s27
      %p41 = scmp.eq.s32.totalorder %s19, 1
      %p42 = por %p40, %p41
      %p44 = scmp.ne.s32.totalorder %s27, %s43
      %p45 = scmp.eq.s32.totalorder %s19, 0
      %p46 = por %p44, %p45
      %s48 = sadd.s32 %s47, 1
      %p51 = scmp.eq.s32.totalorder %s13, 1
      %p52 = scmp.ne.s32.totalorder %s47, %s49
      %p53 = scmp.eq.s32.totalorder %s13, 0
      %p54 = por %p52, %p53
      %p55 = scmp.ne.s32.totalorder %s47, %s49
      %p56 = scmp.eq.s32.totalorder %s18, 1
      %p57 = por %p55, %p56
      %p58 = scmp.ne.s32.totalorder %s49, %s50
      %p59 = scmp.eq.s32.totalorder %s18, 0
      %p60 = por %p58, %p59
      %p61 = scmp.ne.s32.totalorder %s49, %s50
      %p62 = scmp.eq.s32.totalorder %s19, 1
      %p63 = por %p61, %p62
      %p65 = scmp.ne.s32.totalorder %s50, %s64
      %p66 = scmp.eq.s32.totalorder %s19, 0
      %p67 = por %p65, %p66
      %s69 = sadd.s32 %s68, 1
      %p72 = scmp.eq.s32.totalorder %s13, 1
      %p73 = scmp.ne.s32.totalorder %s68, %s70
      %p74 = scmp.eq.s32.totalorder %s13, 0
      %p75 = por %p73, %p74
      %p76 = scmp.ne.s32.totalorder %s68, %s70
      %p77 = scmp.eq.s32.totalorder %s18, 1
      %p78 = por %p76, %p77
      %p79 = scmp.ne.s32.totalorder %s70, %s71
      %p80 = scmp.eq.s32.totalorder %s18, 0
      %p81 = por %p79, %p80
      %p82 = scmp.ne.s32.totalorder %s70, %s71
      %p83 = scmp.eq.s32.totalorder %s19, 1
      %p84 = por %p82, %p83
      %p86 = scmp.ne.s32.totalorder %s71, %s85
      %p87 = scmp.eq.s32.totalorder %s19, 0
      %p88 = por %p86, %p87
      %s90 = sadd.s32 %s89, 1
      %p93 = scmp.eq.s32.totalorder %s13, 1
      %p94 = scmp.ne.s32.totalorder %s89, %s91
      %p95 = scmp.eq.s32.totalorder %s13, 0
      %p96 = por %p94, %p95
      %p97 = scmp.ne.s32.totalorder %s89, %s91
      %p98 = scmp.eq.s32.totalorder %s18, 1
      %p99 = por %p97, %p98
      %p100 = scmp.ne.s32.totalorder %s91, %s92
      %p101 = scmp.eq.s32.totalorder %s18, 0
      %p102 = por %p100, %p101
      %p103 = scmp.ne.s32.totalorder %s91, %s92
      %p104 = scmp.eq.s32.totalorder %s19, 1
      %p105 = por %p103, %p104
      %p107 = scmp.ne.s32.totalorder %s92, %s106
      %p108 = scmp.eq.s32.totalorder %s19, 0
      %p109 = por %p107, %p108
      %s110 = ssub.s32 %s13, %s20
      %p111 = scmp.eq.s32.totalorder %s110, 0
      %s113 = sadd.s32 %s112, 1
      %s114 = scalar_select %p111, %s112, %s113
      %p117 = pneg %p111
      %p118 = scmp.eq.s32.totalorder %s13, 1
      %p119 = por %p117, %p118
      %p120 = scmp.ne.s32.totalorder %s112, %s115
      %p121 = scmp.eq.s32.totalorder %s13, 0
      %p122 = por %p120, %p121
      %p123 = scmp.ne.s32.totalorder %s112, %s115
      %p124 = scmp.eq.s32.totalorder %s18, 1
      %p125 = por %p123, %p124
      %p126 = scmp.ne.s32.totalorder %s115, %s116
      %p127 = scmp.eq.s32.totalorder %s18, 0
      %p128 = por %p126, %p127
      %p129 = scmp.ne.s32.totalorder %s115, %s116
      %p130 = scmp.eq.s32.totalorder %s19, 1
      %p131 = por %p129, %p130
      %p133 = scmp.ne.s32.totalorder %s116, %s132
      %p134 = scmp.eq.s32.totalorder %s19, 0
      %p135 = por %p133, %p134
      %p136 = scmp.le.s32.totalorder 1, %s13
      %p137 = scmp.lt.s32.totalorder %s13, 3
      %p138 = pnand %p136, %p137
      %p139 = pneg %p138
      // Predicated region
      $region9: #{conv_bn.3} parent=5 // pred_check
        _
      $region10: #{conv_bn.3} parent=5 // pred_check_branch
        %141 = sbr.rel (%p138) target = $region12
      $region11: #{conv_bn.3} parent=5 // pred_region
        %s142 = ssub.s32 %s13, 1
        // Predicated region
        $region13: #{conv_bn.3} parent=11 // pred_check
          %p143 = pneg %p60
        $region14: #{conv_bn.3} parent=11 // pred_check_branch
          %145 = sbr.rel (%p143) target = $region16
        $region15: #{conv_bn.3} parent=11 // pred_region
          _
        $region16: #{conv_bn.3} parent=11 // pred_fallthru
          _
        // Predicated region
        $region17: #{conv_bn.3} parent=11 // pred_check
          %p146 = pneg %p81
        $region18: #{conv_bn.3} parent=11 // pred_check_branch
          %148 = sbr.rel (%p146) target = $region20
        $region19: #{conv_bn.3} parent=11 // pred_region
          _
        $region20: #{conv_bn.3} parent=11 // pred_fallthru
          _
        // Predicated region
        $region21: #{conv_bn.3} parent=11 // pred_check
          %p149 = pneg %p102
        $region22: #{conv_bn.3} parent=11 // pred_check_branch
          %151 = sbr.rel (%p149) target = $region24
        $region23: #{conv_bn.3} parent=11 // pred_region
          _
        $region24: #{conv_bn.3} parent=11 // pred_fallthru
          _
      $region12: #{conv_bn.3} parent=5 // pred_fallthru
        _
      %p152 = scmp.lt.s32.totalorder %s13, 2
      // Predicated region
      $region25: #{conv_bn.3} parent=5 // pred_check
        %p153 = pneg %p152
      $region26: #{conv_bn.3} parent=5 // pred_check_branch
        %155 = sbr.rel (%p153) target = $region28
      $region27: #{conv_bn.3} parent=5 // pred_region
        // Predicated region
        $region29: #{conv_bn.3} parent=27 // pred_check
          %p156 = pneg %p33
        $region30: #{conv_bn.3} parent=27 // pred_check_branch
          %158 = sbr.rel (%p156) target = $region32
        $region31: #{conv_bn.3} parent=27 // pred_region
          %s159 = smul.u32 32, %s13
          %p160 = scmp.lt.s32.totalorder %s159, 63
          %s161 = scalar_select %p160, %s159, 63
          %s162 = smul.addr %s161, 4
          %s163 = scalar_lea.vmem %s0, %s162
          %s164 = smul.u32 32, %s13
        $region32: #{conv_bn.3} parent=27 // pred_fallthru
          _
      $region28: #{conv_bn.3} parent=5 // pred_fallthru
        _
      %p165 = scmp.le.s32.totalorder 1, %s13
      %p166 = scmp.lt.s32.totalorder %s13, 3
      %p167 = pnand %p165, %p166
      %p168 = pneg %p167
      // Predicated region
      $region33: #{conv_bn.3} parent=5 // pred_check
        _
      $region34: #{conv_bn.3} parent=5 // pred_check_branch
        %170 = sbr.rel (%p167) target = $region36
      $region35: #{conv_bn.3} parent=5 // pred_region
        %s171 = ssub.s32 %s13, 1
        %s172 = smul.u32 32, %s18
        %p173 = scmp.lt.s32.totalorder %s172, 63
        %s174 = scalar_select %p173, %s172, 63
        %s175 = smul.addr %s174, 4
        %s176 = scalar_lea.vmem %s0, %s175
        %p177 = pneg %p39
        %p178 = pneg %p36
        %p179 = pneg %p60
        %p180 = pneg %p57
        %p181 = pneg %p81
        %p182 = pneg %p78
        %p183 = pneg %p102
        %p184 = pneg %p99
        %p185 = pneg %p128
        %p186 = pneg %p125
        %s187 = sand.u32 %s115, 1
        %s188 = scalar_lea.sflag [#allocation3], %s187
        %s189 = sand.u32 %s115, 1
        %s190 = smul.addr %s189, 128
        %s191 = scalar_lea.vmem [#allocation2], %s190
        %s192 = smul.u32 32, %s18
        %p193 = scmp.lt.s32.totalorder %s192, 63
        %s194 = scalar_select %p193, %s192, 63
        %s195 = smul.addr %s194, 4
        %s196 = scalar_lea.vmem %s0, %s195
        %s197 = smul.u32 32, %s18
        %s198 = smul.u32 32, %s18
        %v199 = vld [vmem:[%s1] sm:$0x3]
        %v200 = vld [vmem:[%s1 + $0x2] sm:$0x3]
        %vm201 = vcmask 1041408
        %v202 = vsel %vm201, %v199, 0.0
        %v203 = vsel %vm201, %v200, 0.0
        %v204 = vadd.f32 %v202, %v203
        %v205 = vmul.f32 %v204, 0.001953125
        %v206 = vmul.f32 %v205, %v205
        %v208 = vrot.slane %v206, 7
        %v210 = vsub.f32 %v205, %v208
        %v211 = vmax.f32 %v210, 0.0
        %v212 = vld [vmem:[%s2] sm:$0x1]
        %v213 = vadd.f32 %v211, 1e-05
        %v214 = vrsqrt.pop %v213
        %v215 = vmul.f32 %v214, %v213
        %v216 = vmul.f32 %v215, %v214
        %v217 = vmul.f32 0.5, %v216
        %v218 = vsub.f32 1.5, %v217
        %v219 = vmul.f32 %v214, %v218
        %vm220 = vweird.f32 %v213
        %vm221 = vweird.f32 %v214
        %vm222 = vmor %vm220, %vm221
        %v223 = vsel %vm222, %v214, %v219
        %225 = vst [vmem:[#allocation1] sm:$0xff] %v223
        %s226 = scalar_lea.vmem [#allocation1], 1
        %v227 = vld [vmem:[%s226] ss:$9 sm:$0xff]
        %v229 = vmul.f32 %v212, %v227
        %v230 = vld [vmem:[%s3] sm:$0x1]
        %v231 = vmul.f32 %v205, %v229
        %v232 = vsub.f32 %v230, %v231
        %v233 = vld [vmem:[%s196] sm:$0xf]
        %v234 = vld [vmem:[%s196 + $0x4] sm:$0xf]
        %v235 = vld [vmem:[%s196 + $0x8] sm:$0xf]
        %v236 = vld [vmem:[%s196 + $0xc] sm:$0xf]
        %v237 = vld [vmem:[%s196 + $0x10] sm:$0xf]
        %v238 = vld [vmem:[%s196 + $0x14] sm:$0xf]
        %v239 = vld [vmem:[%s196 + $0x18] sm:$0xf]
        %v240 = vld [vmem:[%s196 + $0x1c] sm:$0xf]
        %v241 = vld [vmem:[%s196 + $0x20] sm:$0xf]
        %v242 = vld [vmem:[%s196 + $0x24] sm:$0xf]
        %v243 = vld [vmem:[%s196 + $0x28] sm:$0xf]
        %v244 = vld [vmem:[%s196 + $0x2c] sm:$0xf]
        %v245 = vld [vmem:[%s196 + $0x30] sm:$0xf]
        %v246 = vld [vmem:[%s196 + $0x34] sm:$0xf]
        %v247 = vld [vmem:[%s196 + $0x38] sm:$0xf]
        %v248 = vld [vmem:[%s196 + $0x3c] sm:$0xf]
        %v249 = vld [vmem:[%s196 + $0x40] sm:$0xf]
        %v250 = vld [vmem:[%s196 + $0x44] sm:$0xf]
        %v251 = vld [vmem:[%s196 + $0x48] sm:$0xf]
        %v252 = vld [vmem:[%s196 + $0x4c] sm:$0xf]
        %v253 = vld [vmem:[%s196 + $0x50] sm:$0xf]
        %v254 = vld [vmem:[%s196 + $0x54] sm:$0xf]
        %v255 = vld [vmem:[%s196 + $0x58] sm:$0xf]
        %v256 = vld [vmem:[%s196 + $0x5c] sm:$0xf]
        %v257 = vld [vmem:[%s196 + $0x60] sm:$0xf]
        %v258 = vld [vmem:[%s196 + $0x64] sm:$0xf]
        %v259 = vld [vmem:[%s196 + $0x68] sm:$0xf]
        %v260 = vld [vmem:[%s196 + $0x6c] sm:$0xf]
        %v261 = vld [vmem:[%s196 + $0x70] sm:$0xf]
        %v262 = vld [vmem:[%s196 + $0x74] sm:$0xf]
        %v263 = vld [vmem:[%s196 + $0x78] sm:$0xf]
        %v264 = vld [vmem:[%s196 + $0x7c] sm:$0xf]
        %v265 = vunpack.c.l.bf16 %v233
        %v266 = vunpack.c.l.bf16 %v234
        %v267 = vunpack.c.l.bf16 %v235
        %v268 = vunpack.c.l.bf16 %v236
        %v269 = vunpack.c.l.bf16 %v237
        %v270 = vunpack.c.l.bf16 %v238
        %v271 = vunpack.c.l.bf16 %v239
        %v272 = vunpack.c.l.bf16 %v240
        %v273 = vunpack.c.l.bf16 %v241
        %v274 = vunpack.c.l.bf16 %v242
        %v275 = vunpack.c.l.bf16 %v243
        %v276 = vunpack.c.l.bf16 %v244
        %v277 = vunpack.c.l.bf16 %v245
        %v278 = vunpack.c.l.bf16 %v246
        %v279 = vunpack.c.l.bf16 %v247
        %v280 = vunpack.c.l.bf16 %v248
        %v281 = vunpack.c.l.bf16 %v249
        %v282 = vunpack.c.l.bf16 %v250
        %v283 = vunpack.c.l.bf16 %v251
        %v284 = vunpack.c.l.bf16 %v252
        %v285 = vunpack.c.l.bf16 %v253
        %v286 = vunpack.c.l.bf16 %v254
        %v287 = vunpack.c.l.bf16 %v255
        %v288 = vunpack.c.l.bf16 %v256
        %v289 = vunpack.c.l.bf16 %v257
        %v290 = vunpack.c.l.bf16 %v258
        %v291 = vunpack.c.l.bf16 %v259
        %v292 = vunpack.c.l.bf16 %v260
        %v293 = vunpack.c.l.bf16 %v261
        %v294 = vunpack.c.l.bf16 %v262
        %v295 = vunpack.c.l.bf16 %v263
        %v296 = vunpack.c.l.bf16 %v264
        %v298 = vperm.slane %v229, 0
        %v300 = vmul.f32 %v265, %v298
        %v301 = vmul.f32 %v266, %v298
        %v302 = vmul.f32 %v267, %v298
        %v303 = vmul.f32 %v268, %v298
        %v304 = vmul.f32 %v269, %v298
        %v305 = vmul.f32 %v270, %v298
        %v306 = vmul.f32 %v271, %v298
        %v307 = vmul.f32 %v272, %v298
        %v308 = vmul.f32 %v273, %v298
        %v309 = vmul.f32 %v274, %v298
        %v310 = vmul.f32 %v275, %v298
        %v311 = vmul.f32 %v276, %v298
        %v312 = vmul.f32 %v277, %v298
        %v313 = vmul.f32 %v278, %v298
        %v314 = vmul.f32 %v279, %v298
        %v315 = vmul.f32 %v280, %v298
        %v316 = vmul.f32 %v281, %v298
        %v317 = vmul.f32 %v282, %v298
        %v318 = vmul.f32 %v283, %v298
        %v319 = vmul.f32 %v284, %v298
        %v320 = vmul.f32 %v285, %v298
        %v321 = vmul.f32 %v286, %v298
        %v322 = vmul.f32 %v287, %v298
        %v323 = vmul.f32 %v288, %v298
        %v324 = vmul.f32 %v289, %v298
        %v325 = vmul.f32 %v290, %v298
        %v326 = vmul.f32 %v291, %v298
        %v327 = vmul.f32 %v292, %v298
        %v328 = vmul.f32 %v293, %v298
        %v329 = vmul.f32 %v294, %v298
        %v330 = vmul.f32 %v295, %v298
        %v331 = vmul.f32 %v296, %v298
        %v333 = vperm.slane %v232, 0
        %v335 = vadd.f32 %v300, %v333
        %v336 = vadd.f32 %v301, %v333
        %v337 = vadd.f32 %v302, %v333
        %v338 = vadd.f32 %v303, %v333
        %v339 = vadd.f32 %v304, %v333
        %v340 = vadd.f32 %v305, %v333
        %v341 = vadd.f32 %v306, %v333
        %v342 = vadd.f32 %v307, %v333
        %v343 = vadd.f32 %v308, %v333
        %v344 = vadd.f32 %v309, %v333
        %v345 = vadd.f32 %v310, %v333
        %v346 = vadd.f32 %v311, %v333
        %v347 = vadd.f32 %v312, %v333
        %v348 = vadd.f32 %v313, %v333
        %v349 = vadd.f32 %v314, %v333
        %v350 = vadd.f32 %v315, %v333
        %v351 = vadd.f32 %v316, %v333
        %v352 = vadd.f32 %v317, %v333
        %v353 = vadd.f32 %v318, %v333
        %v354 = vadd.f32 %v319, %v333
        %v355 = vadd.f32 %v320, %v333
        %v356 = vadd.f32 %v321, %v333
        %v357 = vadd.f32 %v322, %v333
        %v358 = vadd.f32 %v323, %v333
        %v359 = vadd.f32 %v324, %v333
        %v360 = vadd.f32 %v325, %v333
        %v361 = vadd.f32 %v326, %v333
        %v362 = vadd.f32 %v327, %v333
        %v363 = vadd.f32 %v328, %v333
        %v364 = vadd.f32 %v329, %v333
        %v365 = vadd.f32 %v330, %v333
        %v366 = vadd.f32 %v331, %v333
        %v367 = vmax.f32 %v335, 0.0
        %v368 = vmax.f32 %v336, 0.0
        %v369 = vmax.f32 %v337, 0.0
        %v370 = vmax.f32 %v338, 0.0
        %v371 = vmax.f32 %v339, 0.0
        %v372 = vmax.f32 %v340, 0.0
        %v373 = vmax.f32 %v341, 0.0
        %v374 = vmax.f32 %v342, 0.0
        %v375 = vmax.f32 %v343, 0.0
        %v376 = vmax.f32 %v344, 0.0
        %v377 = vmax.f32 %v345, 0.0
        %v378 = vmax.f32 %v346, 0.0
        %v379 = vmax.f32 %v347, 0.0
        %v380 = vmax.f32 %v348, 0.0
        %v381 = vmax.f32 %v349, 0.0
        %v382 = vmax.f32 %v350, 0.0
        %v383 = vmax.f32 %v351, 0.0
        %v384 = vmax.f32 %v352, 0.0
        %v385 = vmax.f32 %v353, 0.0
        %v386 = vmax.f32 %v354, 0.0
        %v387 = vmax.f32 %v355, 0.0
        %v388 = vmax.f32 %v356, 0.0
        %v389 = vmax.f32 %v357, 0.0
        %v390 = vmax.f32 %v358, 0.0
        %v391 = vmax.f32 %v359, 0.0
        %v392 = vmax.f32 %v360, 0.0
        %v393 = vmax.f32 %v361, 0.0
        %v394 = vmax.f32 %v362, 0.0
        %v395 = vmax.f32 %v363, 0.0
        %v396 = vmax.f32 %v364, 0.0
        %v397 = vmax.f32 %v365, 0.0
        %v398 = vmax.f32 %v366, 0.0
        %v399 = vpack.c.bf16 %v367, %v367
        %v400 = vpack.c.bf16 %v368, %v368
        %v401 = vpack.c.bf16 %v369, %v369
        %v402 = vpack.c.bf16 %v370, %v370
        %v403 = vpack.c.bf16 %v371, %v371
        %v404 = vpack.c.bf16 %v372, %v372
        %v405 = vpack.c.bf16 %v373, %v373
        %v406 = vpack.c.bf16 %v374, %v374
        %v407 = vpack.c.bf16 %v375, %v375
        %v408 = vpack.c.bf16 %v376, %v376
        %v409 = vpack.c.bf16 %v377, %v377
        %v410 = vpack.c.bf16 %v378, %v378
        %v411 = vpack.c.bf16 %v379, %v379
        %v412 = vpack.c.bf16 %v380, %v380
        %v413 = vpack.c.bf16 %v381, %v381
        %v414 = vpack.c.bf16 %v382, %v382
        %v415 = vpack.c.bf16 %v383, %v383
        %v416 = vpack.c.bf16 %v384, %v384
        %v417 = vpack.c.bf16 %v385, %v385
        %v418 = vpack.c.bf16 %v386, %v386
        %v419 = vpack.c.bf16 %v387, %v387
        %v420 = vpack.c.bf16 %v388, %v388
        %v421 = vpack.c.bf16 %v389, %v389
        %v422 = vpack.c.bf16 %v390, %v390
        %v423 = vpack.c.bf16 %v391, %v391
        %v424 = vpack.c.bf16 %v392, %v392
        %v425 = vpack.c.bf16 %v393, %v393
        %v426 = vpack.c.bf16 %v394, %v394
        %v427 = vpack.c.bf16 %v395, %v395
        %v428 = vpack.c.bf16 %v396, %v396
        %v429 = vpack.c.bf16 %v397, %v397
        %v430 = vpack.c.bf16 %v398, %v398
        %431 = vst [vmem:[%s191] sm:$0xf] %v399
        %432 = vst [vmem:[%s191 + $0x4] sm:$0xf] %v400
        %433 = vst [vmem:[%s191 + $0x8] sm:$0xf] %v401
        %434 = vst [vmem:[%s191 + $0xc] sm:$0xf] %v402
        %435 = vst [vmem:[%s191 + $0x10] sm:$0xf] %v403
        %436 = vst [vmem:[%s191 + $0x14] sm:$0xf] %v404
        %437 = vst [vmem:[%s191 + $0x18] sm:$0xf] %v405
        %438 = vst [vmem:[%s191 + $0x1c] sm:$0xf] %v406
        %439 = vst [vmem:[%s191 + $0x20] sm:$0xf] %v407
        %440 = vst [vmem:[%s191 + $0x24] sm:$0xf] %v408
        %441 = vst [vmem:[%s191 + $0x28] sm:$0xf] %v409
        %442 = vst [vmem:[%s191 + $0x2c] sm:$0xf] %v410
        %443 = vst [vmem:[%s191 + $0x30] sm:$0xf] %v411
        %444 = vst [vmem:[%s191 + $0x34] sm:$0xf] %v412
        %445 = vst [vmem:[%s191 + $0x38] sm:$0xf] %v413
        %446 = vst [vmem:[%s191 + $0x3c] sm:$0xf] %v414
        %447 = vst [vmem:[%s191 + $0x40] sm:$0xf] %v415
        %448 = vst [vmem:[%s191 + $0x44] sm:$0xf] %v416
        %449 = vst [vmem:[%s191 + $0x48] sm:$0xf] %v417
        %450 = vst [vmem:[%s191 + $0x4c] sm:$0xf] %v418
        %451 = vst [vmem:[%s191 + $0x50] sm:$0xf] %v419
        %452 = vst [vmem:[%s191 + $0x54] sm:$0xf] %v420
        %453 = vst [vmem:[%s191 + $0x58] sm:$0xf] %v421
        %454 = vst [vmem:[%s191 + $0x5c] sm:$0xf] %v422
        %455 = vst [vmem:[%s191 + $0x60] sm:$0xf] %v423
        %456 = vst [vmem:[%s191 + $0x64] sm:$0xf] %v424
        %457 = vst [vmem:[%s191 + $0x68] sm:$0xf] %v425
        %458 = vst [vmem:[%s191 + $0x6c] sm:$0xf] %v426
        %459 = vst [vmem:[%s191 + $0x70] sm:$0xf] %v427
        %460 = vst [vmem:[%s191 + $0x74] sm:$0xf] %v428
        %461 = vst [vmem:[%s191 + $0x78] sm:$0xf] %v429
        %462 = vst [vmem:[%s191 + $0x7c] sm:$0xf] %v430
        %s463 = sand.u32 %s115, 1
        %s464 = scalar_lea.sflag [#allocation3], %s463
        %s465 = sand.u32 %s115, 1
        %s466 = smul.addr %s465, 128
        %s467 = scalar_lea.vmem [#allocation2], %s466
        // Predicated region
        $region37: #{conv_bn.3} parent=35 // pred_check
          %p468 = pneg %p125
        $region38: #{conv_bn.3} parent=35 // pred_check_branch
          %470 = sbr.rel (%p468) target = $region40
        $region39: #{conv_bn.3} parent=35 // pred_region
          %s471 = smul.u32 32, %s18
          %473 = vsyncadd %s464, 0
          %s474 = smul.addr %s471, 4
          %s475 = scalar_lea.hbm %s4, %s474
          %s476 = sshll.u32 %s467, 4
          %s477 = int_to_ptr.vmem [resolvable:$true] %s476
          %s478 = sshll.u32 %s475, 4
          %s479 = int_to_ptr.hbm [resolvable:$true] %s478
          %484 = dma.vmem_to_hbm [thread:$0]  %s477, 2048, %s479, %s464, 64, 64, 4
        $region40: #{conv_bn.3} parent=35 // pred_fallthru
          _
      $region36: #{conv_bn.3} parent=5 // pred_fallthru
        _
      %p485 = scmp.le.s32.totalorder 2, %s13
      // Predicated region
      $region41: #{conv_bn.3} parent=5 // pred_check
        %p486 = pneg %p485
      $region42: #{conv_bn.3} parent=5 // pred_check_branch
        %488 = sbr.rel (%p486) target = $region44
      $region43: #{conv_bn.3} parent=5 // pred_region
        %s489 = ssub.s32 %s13, 2
        // Predicated region
        $region45: #{conv_bn.3} parent=43 // pred_check
          %p490 = pneg %p131
        $region46: #{conv_bn.3} parent=43 // pred_check_branch
          %492 = sbr.rel (%p490) target = $region48
        $region47: #{conv_bn.3} parent=43 // pred_region
          %s493 = sand.u32 %s116, 1
          %s494 = scalar_lea.sflag [#allocation3], %s493
          %s495 = sand.u32 %s116, 1
          %s496 = smul.addr %s495, 128
          %s497 = scalar_lea.vmem [#allocation2], %s496
          %499 = dma.done %s494, 2048
        $region48: #{conv_bn.3} parent=43 // pred_fallthru
          _
      $region44: #{conv_bn.3} parent=5 // pred_fallthru
        _
    $region6: #{conv_bn.3} parent=1 // loop_footer
      %s17 = sadd.s32 1, %s13
    $region7: #{conv_bn.3} parent=1 // loop_footer_branch
      %12 = sbr.rel target = $region3
    $region8: #{conv_bn.3} parent=1 // loop_exit
      _
    %500 = vsyncpa [#allocation3], 1
    %s501 = scalar_lea.sflag [#allocation3], 1
    %502 = vsyncpa %s501, 1

// kernel: conv_bn.2
$region0: #{conv_bn.2}
  #allocation0 [shape = 'u32[]', space=smem, size = 0x4, offset = 0x4, fixed_abs, tag = 'smem constant byte address 0x4 - core index']
  #allocation1 [shape = 'u32[72,128]{1,0:T(1,128)}', space=vmem, size = 0x9000, scoped, tag = 'internal scratch']
  #allocation2 [shape = 'f32[256,128]{1,0:T(8,128)}', space=vmem, size = 0x20000, scoped, tag = 'scratch operand']
  %s0 = inlined_call_operand.vmem [shape: bf16[512,256], index: 0, kind: input, shape index: {}]
  %s1 = inlined_call_operand.vmem [shape: bf16[256,128], index: 1, kind: input, shape index: {}]
  %s2 = inlined_call_operand.vmem [shape: bf16[512,128], index: 2, kind: output, shape index: {0}]
  %s3 = inlined_call_operand.vmem [shape: f32[2,2,128], index: 3, kind: output, shape index: {1}]
  %4 = xla_tuple %s2, %s3
  %s5 = sld [smem:[#allocation0]]
  $region57: #{conv_bn.2} parent=0
    _
  %s7 = ssub.s32 1, %s5
  %s8 = scalar_select 0, %s7, %s5
  loop: start=0, step=1, limit=4
  $region2: #{conv_bn.2} parent=0 // loop_pre_header
    _
  $region3: #{conv_bn.2} parent=0 // loop_header
    %s10 = sphi 0, %s14
    %p11 = scmp.ge.s32.totalorder %s10, 4
    %s17 = sphi 0, %s29
    %s18 = sphi 0, %s25
    %s19 = sphi 0, %s17
    %s20 = sphi 0, %s18
    %s21 = sphi 0, %s19
    %s22 = sphi 0, %s20
    %s34 = sphi 0, %s36
    %s37 = sphi 0, %s34
    %s38 = sphi 0, %s37
    %s54 = sphi 0, %s38
    %s60 = sphi 0, %s62
    %s63 = sphi 0, %s60
    %s64 = sphi 0, %s63
    %s80 = sphi 0, %s64
    %s86 = sphi 0, %s88
    %s89 = sphi 0, %s86
    %s90 = sphi 0, %s89
    %s106 = sphi 0, %s90
    %s112 = sphi 0, %s114
    %s115 = sphi 0, %s112
    %s116 = sphi 0, %s115
    %s132 = sphi 0, %s116
  $region4: #{conv_bn.2} parent=0 // loop_header_branch
    %13 = sbr.rel (%p11) target = $region8
  $region5: #{conv_bn.2} parent=0 // loop_body
    %s15 = ssub.s32 %s10, 1
    %s16 = ssub.s32 %s10, 2
    %s23 = sadd.s32 1, %s18
    %p24 = scmp.ge.s32.totalorder %s23, 1
    %s25 = scalar_select %p24, 0, %s23
    %s26 = sadd.s32 1, %s17
    %s27 = scalar_select %p24, %s26, %s17
    %p28 = scmp.ge.s32.totalorder %s27, 2
    %s29 = scalar_select %p28, 0, %s27
    %s30 = ssub.s32 %s17, %s29
    %s31 = ssub.s32 %s18, %s25
    %s32 = sor.u32 %s30, %s31
    %p33 = scmp.eq.s32.totalorder %s32, 0
    %s35 = sadd.s32 %s34, 1
    %s36 = scalar_select %p33, %s34, %s35
    %p39 = pneg %p33
    %p40 = scmp.eq.s32.totalorder %s10, 1
    %p41 = por %p39, %p40
    %p42 = scmp.ne.s32.totalorder %s34, %s37
    %p43 = scmp.eq.s32.totalorder %s10, 0
    %p44 = por %p42, %p43
    %p45 = scmp.ne.s32.totalorder %s34, %s37
    %p46 = scmp.eq.s32.totalorder %s15, 1
    %p47 = por %p45, %p46
    %p48 = scmp.ne.s32.totalorder %s37, %s38
    %p49 = scmp.eq.s32.totalorder %s15, 0
    %p50 = por %p48, %p49
    %p51 = scmp.ne.s32.totalorder %s37, %s38
    %p52 = scmp.eq.s32.totalorder %s16, 1
    %p53 = por %p51, %p52
    %p55 = scmp.ne.s32.totalorder %s38, %s54
    %p56 = scmp.eq.s32.totalorder %s16, 0
    %p57 = por %p55, %p56
    %s58 = ssub.s32 %s18, %s25
    %p59 = scmp.eq.s32.totalorder %s58, 0
    %s61 = sadd.s32 %s60, 1
    %s62 = scalar_select %p59, %s60, %s61
    %p65 = pneg %p59
    %p66 = scmp.eq.s32.totalorder %s10, 1
    %p67 = por %p65, %p66
    %p68 = scmp.ne.s32.totalorder %s60, %s63
    %p69 = scmp.eq.s32.totalorder %s10, 0
    %p70 = por %p68, %p69
    %p71 = scmp.ne.s32.totalorder %s60, %s63
    %p72 = scmp.eq.s32.totalorder %s15, 1
    %p73 = por %p71, %p72
    %p74 = scmp.ne.s32.totalorder %s63, %s64
    %p75 = scmp.eq.s32.totalorder %s15, 0
    %p76 = por %p74, %p75
    %p77 = scmp.ne.s32.totalorder %s63, %s64
    %p78 = scmp.eq.s32.totalorder %s16, 1
    %p79 = por %p77, %p78
    %p81 = scmp.ne.s32.totalorder %s64, %s80
    %p82 = scmp.eq.s32.totalorder %s16, 0
    %p83 = por %p81, %p82
    %s84 = ssub.s32 %s17, %s29
    %p85 = scmp.eq.s32.totalorder %s84, 0
    %s87 = sadd.s32 %s86, 1
    %s88 = scalar_select %p85, %s86, %s87
    %p91 = pneg %p85
    %p92 = scmp.eq.s32.totalorder %s10, 1
    %p93 = por %p91, %p92
    %p94 = scmp.ne.s32.totalorder %s86, %s89
    %p95 = scmp.eq.s32.totalorder %s10, 0
    %p96 = por %p94, %p95
    %p97 = scmp.ne.s32.totalorder %s86, %s89
    %p98 = scmp.eq.s32.totalorder %s15, 1
    %p99 = por %p97, %p98
    %p100 = scmp.ne.s32.totalorder %s89, %s90
    %p101 = scmp.eq.s32.totalorder %s15, 0
    %p102 = por %p100, %p101
    %p103 = scmp.ne.s32.totalorder %s89, %s90
    %p104 = scmp.eq.s32.totalorder %s16, 1
    %p105 = por %p103, %p104
    %p107 = scmp.ne.s32.totalorder %s90, %s106
    %p108 = scmp.eq.s32.totalorder %s16, 0
    %p109 = por %p107, %p108
    %s110 = ssub.s32 %s17, %s29
    %p111 = scmp.eq.s32.totalorder %s110, 0
    %s113 = sadd.s32 %s112, 1
    %s114 = scalar_select %p111, %s112, %s113
    %p117 = pneg %p111
    %p118 = scmp.eq.s32.totalorder %s10, 1
    %p119 = por %p117, %p118
    %p120 = scmp.ne.s32.totalorder %s112, %s115
    %p121 = scmp.eq.s32.totalorder %s10, 0
    %p122 = por %p120, %p121
    %p123 = scmp.ne.s32.totalorder %s112, %s115
    %p124 = scmp.eq.s32.totalorder %s15, 1
    %p125 = por %p123, %p124
    %p126 = scmp.ne.s32.totalorder %s115, %s116
    %p127 = scmp.eq.s32.totalorder %s15, 0
    %p128 = por %p126, %p127
    %p129 = scmp.ne.s32.totalorder %s115, %s116
    %p130 = scmp.eq.s32.totalorder %s16, 1
    %p131 = por %p129, %p130
    %p133 = scmp.ne.s32.totalorder %s116, %s132
    %p134 = scmp.eq.s32.totalorder %s16, 0
    %p135 = por %p133, %p134
    %p136 = scmp.le.s32.totalorder 1, %s10
    %p137 = scmp.lt.s32.totalorder %s10, 3
    %p138 = pnand %p136, %p137
    %p139 = pneg %p138
    // Predicated region
    $region9: #{conv_bn.2} parent=5 // pred_check
      _
    $region10: #{conv_bn.2} parent=5 // pred_check_branch
      %141 = sbr.rel (%p138) target = $region12
    $region11: #{conv_bn.2} parent=5 // pred_region
      %s142 = ssub.s32 %s10, 1
      // Predicated region
      $region13: #{conv_bn.2} parent=11 // pred_check
        %p143 = pneg %p76
      $region14: #{conv_bn.2} parent=11 // pred_check_branch
        %145 = sbr.rel (%p143) target = $region16
      $region15: #{conv_bn.2} parent=11 // pred_region
        %s146 = smul.u32 32, %s20
        %p147 = scmp.lt.s32.totalorder %s146, 31
        %s148 = scalar_select %p147, %s146, 31
        %s149 = smul.addr %s148, 4
        %s150 = scalar_lea.vmem %s1, %s149
        %s151 = smul.u32 32, %s20
      $region16: #{conv_bn.2} parent=11 // pred_fallthru
        _
    $region12: #{conv_bn.2} parent=5 // pred_fallthru
      _
    %p152 = scmp.lt.s32.totalorder %s10, 2
    // Predicated region
    $region17: #{conv_bn.2} parent=5 // pred_check
      %p153 = pneg %p152
    $region18: #{conv_bn.2} parent=5 // pred_check_branch
      %155 = sbr.rel (%p153) target = $region20
    $region19: #{conv_bn.2} parent=5 // pred_region
      // Predicated region
      $region21: #{conv_bn.2} parent=19 // pred_check
        %p156 = pneg %p44
      $region22: #{conv_bn.2} parent=19 // pred_check_branch
        %158 = sbr.rel (%p156) target = $region24
      $region23: #{conv_bn.2} parent=19 // pred_region
        %s159 = smul.u32 32, %s17
        %s160 = smul.u32 2, %s18
        %p161 = scmp.lt.s32.totalorder %s159, 63
        %s162 = scalar_select %p161, %s159, 63
        %p163 = scmp.lt.s32.totalorder %s160, 1
        %s164 = scalar_select %p163, %s160, 1
        %s165 = smul.addr %s162, 2
        %s166 = sadd.s32 %s164, %s165
        %s167 = smul.addr %s166, 4
        %s168 = scalar_lea.vmem %s0, %s167
        %s169 = smul.u32 32, %s17
        %s170 = smul.u32 2, %s18
      $region24: #{conv_bn.2} parent=19 // pred_fallthru
        _
    $region20: #{conv_bn.2} parent=5 // pred_fallthru
      _
    %p171 = scmp.le.s32.totalorder 1, %s10
    %p172 = scmp.lt.s32.totalorder %s10, 3
    %p173 = pnand %p171, %p172
    %p174 = pneg %p173
    // Predicated region
    $region25: #{conv_bn.2} parent=5 // pred_check
      _
    $region26: #{conv_bn.2} parent=5 // pred_check_branch
      %176 = sbr.rel (%p173) target = $region28
    $region27: #{conv_bn.2} parent=5 // pred_region
      %s177 = ssub.s32 %s10, 1
      %s178 = smul.u32 32, %s19
      %s179 = smul.u32 2, %s20
      %p180 = scmp.lt.s32.totalorder %s178, 63
      %s181 = scalar_select %p180, %s178, 63
      %p182 = scmp.lt.s32.totalorder %s179, 1
      %s183 = scalar_select %p182, %s179, 1
      %s184 = smul.addr %s181, 2
      %s185 = sadd.s32 %s183, %s184
      %s186 = smul.addr %s185, 4
      %s187 = scalar_lea.vmem %s0, %s186
      %p188 = pneg %p50
      %p189 = pneg %p47
      %s190 = smul.u32 32, %s20
      %p191 = scmp.lt.s32.totalorder %s190, 31
      %s192 = scalar_select %p191, %s190, 31
      %s193 = smul.addr %s192, 4
      %s194 = scalar_lea.vmem %s1, %s193
      %p195 = pneg %p76
      %p196 = pneg %p73
      %p197 = pneg %p102
      %p198 = pneg %p99
      %s199 = smul.u32 32, %s19
      %p200 = scmp.lt.s32.totalorder %s199, 63
      %s201 = scalar_select %p200, %s199, 63
      %s202 = smul.addr %s201, 4
      %s203 = scalar_lea.vmem %s2, %s202
      %p204 = pneg %p128
      %p205 = pneg %p125
      %p206 = scmp.lt.s32.totalorder %s19, 1
      %s207 = scalar_select %p206, %s19, 1
      %s208 = smul.addr %s207, 2
      %s209 = scalar_lea.vmem %s3, %s208
      %s210 = smul.u32 32, %s19
      %s211 = smul.u32 2, %s20
      %p212 = scmp.lt.s32.totalorder %s210, 63
      %s213 = scalar_select %p212, %s210, 63
      %p214 = scmp.lt.s32.totalorder %s211, 1
      %s215 = scalar_select %p214, %s211, 1
      %s216 = smul.addr %s213, 2
      %s217 = sadd.s32 %s215, %s216
      %s218 = smul.addr %s217, 4
      %s219 = scalar_lea.vmem %s0, %s218
      %s220 = smul.u32 32, %s19
      %s221 = smul.u32 2, %s20
      %s222 = smul.u32 32, %s20
      %p223 = scmp.lt.s32.totalorder %s222, 31
      %s224 = scalar_select %p223, %s222, 31
      %s225 = smul.addr %s224, 4
      %s226 = scalar_lea.vmem %s1, %s225
      %s227 = smul.u32 32, %s20
      %s228 = smul.u32 32, %s19
      %p229 = scmp.lt.s32.totalorder %s228, 63
      %s230 = scalar_select %p229, %s228, 63
      %s231 = smul.addr %s230, 4
      %s232 = scalar_lea.vmem %s2, %s231
      %s233 = smul.u32 32, %s19
      %p234 = scmp.lt.s32.totalorder %s19, 1
      %s235 = scalar_select %p234, %s19, 1
      %s236 = smul.addr %s235, 2
      %s237 = scalar_lea.vmem %s3, %s236
      %p238 = scmp.eq.s32.totalorder %s20, 0
      // Predicated region
      $region29: #{conv_bn.2} parent=27 // pred_check
        %p239 = pneg %p238
      $region30: #{conv_bn.2} parent=27 // pred_check_branch
        %241 = sbr.rel (%p239) target = $region32
      $region31: #{conv_bn.2} parent=27 // pred_region
        %242 = vst [vmem:[#allocation2] sm:$0xff] 0.0
        %243 = vst [vmem:[#allocation2 + $0x8] sm:$0xff] 0.0
        %244 = vst [vmem:[#allocation2 + $0x10] sm:$0xff] 0.0
        %245 = vst [vmem:[#allocation2 + $0x18] sm:$0xff] 0.0
        %246 = vst [vmem:[#allocation2 + $0x20] sm:$0xff] 0.0
        %247 = vst [vmem:[#allocation2 + $0x28] sm:$0xff] 0.0
        %248 = vst [vmem:[#allocation2 + $0x30] sm:$0xff] 0.0
        %249 = vst [vmem:[#allocation2 + $0x38] sm:$0xff] 0.0
        %250 = vst [vmem:[#allocation2 + $0x40] sm:$0xff] 0.0
        %251 = vst [vmem:[#allocation2 + $0x48] sm:$0xff] 0.0
        %252 = vst [vmem:[#allocation2 + $0x50] sm:$0xff] 0.0
        %253 = vst [vmem:[#allocation2 + $0x58] sm:$0xff] 0.0
        %254 = vst [vmem:[#allocation2 + $0x60] sm:$0xff] 0.0
        %255 = vst [vmem:[#allocation2 + $0x68] sm:$0xff] 0.0
        %256 = vst [vmem:[#allocation2 + $0x70] sm:$0xff] 0.0
        %257 = vst [vmem:[#allocation2 + $0x78] sm:$0xff] 0.0
        %258 = vst [vmem:[#allocation2 + $0x80] sm:$0xff] 0.0
        %259 = vst [vmem:[#allocation2 + $0x88] sm:$0xff] 0.0
        %260 = vst [vmem:[#allocation2 + $0x90] sm:$0xff] 0.0
        %261 = vst [vmem:[#allocation2 + $0x98] sm:$0xff] 0.0
        %262 = vst [vmem:[#allocation2 + $0xa0] sm:$0xff] 0.0
        %263 = vst [vmem:[#allocation2 + $0xa8] sm:$0xff] 0.0
        %264 = vst [vmem:[#allocation2 + $0xb0] sm:$0xff] 0.0
        %265 = vst [vmem:[#allocation2 + $0xb8] sm:$0xff] 0.0
        %266 = vst [vmem:[#allocation2 + $0xc0] sm:$0xff] 0.0
        %267 = vst [vmem:[#allocation2 + $0xc8] sm:$0xff] 0.0
        %268 = vst [vmem:[#allocation2 + $0xd0] sm:$0xff] 0.0
        %269 = vst [vmem:[#allocation2 + $0xd8] sm:$0xff] 0.0
        %270 = vst [vmem:[#allocation2 + $0xe0] sm:$0xff] 0.0
        %271 = vst [vmem:[#allocation2 + $0xe8] sm:$0xff] 0.0
        %272 = vst [vmem:[#allocation2 + $0xf0] sm:$0xff] 0.0
        %273 = vst [vmem:[#allocation2 + $0xf8] sm:$0xff] 0.0
      $region32: #{conv_bn.2} parent=27 // pred_fallthru
        _
      %v274 = vld [vmem:[#allocation2] sm:$0xff]
      %v275 = vld [vmem:[#allocation2 + $0x8] sm:$0xff]
      %v276 = vld [vmem:[#allocation2 + $0x10] sm:$0xff]
      %v277 = vld [vmem:[#allocation2 + $0x18] sm:$0xff]
      %v278 = vld [vmem:[#allocation2 + $0x20] sm:$0xff]
      %v279 = vld [vmem:[#allocation2 + $0x28] sm:$0xff]
      %v280 = vld [vmem:[#allocation2 + $0x30] sm:$0xff]
      %v281 = vld [vmem:[#allocation2 + $0x38] sm:$0xff]
      %v282 = vld [vmem:[#allocation2 + $0x40] sm:$0xff]
      %v283 = vld [vmem:[#allocation2 + $0x48] sm:$0xff]
      %v284 = vld [vmem:[#allocation2 + $0x50] sm:$0xff]
      %v285 = vld [vmem:[#allocation2 + $0x58] sm:$0xff]
      %v286 = vld [vmem:[#allocation2 + $0x60] sm:$0xff]
      %v287 = vld [vmem:[#allocation2 + $0x68] sm:$0xff]
      %v288 = vld [vmem:[#allocation2 + $0x70] sm:$0xff]
      %v289 = vld [vmem:[#allocation2 + $0x78] sm:$0xff]
      %v290 = vld [vmem:[#allocation2 + $0x80] sm:$0xff]
      %v291 = vld [vmem:[#allocation2 + $0x88] sm:$0xff]
      %v292 = vld [vmem:[#allocation2 + $0x90] sm:$0xff]
      %v293 = vld [vmem:[#allocation2 + $0x98] sm:$0xff]
      %v294 = vld [vmem:[#allocation2 + $0xa0] sm:$0xff]
      %v295 = vld [vmem:[#allocation2 + $0xa8] sm:$0xff]
      %v296 = vld [vmem:[#allocation2 + $0xb0] sm:$0xff]
      %v297 = vld [vmem:[#allocation2 + $0xb8] sm:$0xff]
      %v298 = vld [vmem:[#allocation2 + $0xc0] sm:$0xff]
      %v299 = vld [vmem:[#allocation2 + $0xc8] sm:$0xff]
      %v300 = vld [vmem:[#allocation2 + $0xd0] sm:$0xff]
      %v301 = vld [vmem:[#allocation2 + $0xd8] sm:$0xff]
      %v302 = vld [vmem:[#allocation2 + $0xe0] sm:$0xff]
      %v303 = vld [vmem:[#allocation2 + $0xe8] sm:$0xff]
      %v304 = vld [vmem:[#allocation2 + $0xf0] sm:$0xff]
      %v305 = vld [vmem:[#allocation2 + $0xf8] sm:$0xff]
      %v306 = vld [vmem:[%s219] sm:$0xff]
      %v307 = vld [vmem:[%s219 + $0x8] sm:$0xff]
      %v308 = vld [vmem:[%s219 + $0x10] sm:$0xff]
      %v309 = vld [vmem:[%s219 + $0x18] sm:$0xff]
      %v310 = vld [vmem:[%s219 + $0x20] sm:$0xff]
      %v311 = vld [vmem:[%s219 + $0x28] sm:$0xff]
      %v312 = vld [vmem:[%s219 + $0x30] sm:$0xff]
      %v313 = vld [vmem:[%s219 + $0x38] sm:$0xff]
      %v314 = vld [vmem:[%s219 + $0x40] sm:$0xff]
      %v315 = vld [vmem:[%s219 + $0x48] sm:$0xff]
      %v316 = vld [vmem:[%s219 + $0x50] sm:$0xff]
      %v317 = vld [vmem:[%s219 + $0x58] sm:$0xff]
      %v318 = vld [vmem:[%s219 + $0x60] sm:$0xff]
      %v319 = vld [vmem:[%s219 + $0x68] sm:$0xff]
      %v320 = vld [vmem:[%s219 + $0x70] sm:$0xff]
      %v321 = vld [vmem:[%s219 + $0x78] sm:$0xff]
      %v322 = vld [vmem:[%s219 + $0x80] sm:$0xff]
      %v323 = vld [vmem:[%s219 + $0x88] sm:$0xff]
      %v324 = vld [vmem:[%s219 + $0x90] sm:$0xff]
      %v325 = vld [vmem:[%s219 + $0x98] sm:$0xff]
      %v326 = vld [vmem:[%s219 + $0xa0] sm:$0xff]
      %v327 = vld [vmem:[%s219 + $0xa8] sm:$0xff]
      %v328 = vld [vmem:[%s219 + $0xb0] sm:$0xff]
      %v329 = vld [vmem:[%s219 + $0xb8] sm:$0xff]
      %v330 = vld [vmem:[%s219 + $0xc0] sm:$0xff]
      %v331 = vld [vmem:[%s219 + $0xc8] sm:$0xff]
      %v332 = vld [vmem:[%s219 + $0xd0] sm:$0xff]
      %v333 = vld [vmem:[%s219 + $0xd8] sm:$0xff]
      %v334 = vld [vmem:[%s219 + $0xe0] sm:$0xff]
      %v335 = vld [vmem:[%s219 + $0xe8] sm:$0xff]
      %v336 = vld [vmem:[%s219 + $0xf0] sm:$0xff]
      %v337 = vld [vmem:[%s219 + $0xf8] sm:$0xff]
      %v338 = vld [vmem:[%s226] sm:$0xf]
      %v339 = vld [vmem:[%s226 + $0x4] sm:$0xf]
      %v340 = vld [vmem:[%s226 + $0x8] sm:$0xf]
      %v341 = vld [vmem:[%s226 + $0xc] sm:$0xf]
      %v342 = vld [vmem:[%s226 + $0x10] sm:$0xf]
      %v343 = vld [vmem:[%s226 + $0x14] sm:$0xf]
      %v344 = vld [vmem:[%s226 + $0x18] sm:$0xf]
      %v345 = vld [vmem:[%s226 + $0x1c] sm:$0xf]
      %v346 = vld [vmem:[%s226 + $0x20] sm:$0xf]
      %v347 = vld [vmem:[%s226 + $0x24] sm:$0xf]
      %v348 = vld [vmem:[%s226 + $0x28] sm:$0xf]
      %v349 = vld [vmem:[%s226 + $0x2c] sm:$0xf]
      %v350 = vld [vmem:[%s226 + $0x30] sm:$0xf]
      %v351 = vld [vmem:[%s226 + $0x34] sm:$0xf]
      %v352 = vld [vmem:[%s226 + $0x38] sm:$0xf]
      %v353 = vld [vmem:[%s226 + $0x3c] sm:$0xf]
      %v354 = vld [vmem:[%s226 + $0x40] sm:$0xf]
      %v355 = vld [vmem:[%s226 + $0x44] sm:$0xf]
      %v356 = vld [vmem:[%s226 + $0x48] sm:$0xf]
      %v357 = vld [vmem:[%s226 + $0x4c] sm:$0xf]
      %v358 = vld [vmem:[%s226 + $0x50] sm:$0xf]
      %v359 = vld [vmem:[%s226 + $0x54] sm:$0xf]
      %v360 = vld [vmem:[%s226 + $0x58] sm:$0xf]
      %v361 = vld [vmem:[%s226 + $0x5c] sm:$0xf]
      %v362 = vld [vmem:[%s226 + $0x60] sm:$0xf]
      %v363 = vld [vmem:[%s226 + $0x64] sm:$0xf]
      %v364 = vld [vmem:[%s226 + $0x68] sm:$0xf]
      %v365 = vld [vmem:[%s226 + $0x6c] sm:$0xf]
      %v366 = vld [vmem:[%s226 + $0x70] sm:$0xf]
      %v367 = vld [vmem:[%s226 + $0x74] sm:$0xf]
      %v368 = vld [vmem:[%s226 + $0x78] sm:$0xf]
      %v369 = vld [vmem:[%s226 + $0x7c] sm:$0xf]
      %v402 = vunpack.c.l.b16 %v306
      %v403 = vunpack.c.h.b16 %v306
      %v404 = vunpack.c.l.b16 %v307
      %v405 = vunpack.c.h.b16 %v307
      %v406 = vunpack.c.l.b16 %v308
      %v407 = vunpack.c.h.b16 %v308
      %v408 = vunpack.c.l.b16 %v309
      %v409 = vunpack.c.h.b16 %v309
      %v410 = vunpack.c.l.b16 %v310
      %v411 = vunpack.c.h.b16 %v310
      %v412 = vunpack.c.l.b16 %v311
      %v413 = vunpack.c.h.b16 %v311
      %v414 = vunpack.c.l.b16 %v312
      %v415 = vunpack.c.h.b16 %v312
      %v416 = vunpack.c.l.b16 %v313
      %v417 = vunpack.c.h.b16 %v313
      %v418 = vunpack.c.l.b16 %v314
      %v419 = vunpack.c.h.b16 %v314
      %v420 = vunpack.c.l.b16 %v315
      %v421 = vunpack.c.h.b16 %v315
      %v422 = vunpack.c.l.b16 %v316
      %v423 = vunpack.c.h.b16 %v316
      %v424 = vunpack.c.l.b16 %v317
      %v425 = vunpack.c.h.b16 %v317
      %v426 = vunpack.c.l.b16 %v318
      %v427 = vunpack.c.h.b16 %v318
      %v428 = vunpack.c.l.b16 %v319
      %v429 = vunpack.c.h.b16 %v319
      %v430 = vunpack.c.l.b16 %v320
      %v431 = vunpack.c.h.b16 %v320
      %v432 = vunpack.c.l.b16 %v321
      %v433 = vunpack.c.h.b16 %v321
      %v434 = vunpack.c.l.b16 %v322
      %v435 = vunpack.c.h.b16 %v322
      %v436 = vunpack.c.l.b16 %v323
      %v437 = vunpack.c.h.b16 %v323
      %v438 = vunpack.c.l.b16 %v324
      %v439 = vunpack.c.h.b16 %v324
      %v440 = vunpack.c.l.b16 %v325
      %v441 = vunpack.c.h.b16 %v325
      %v442 = vunpack.c.l.b16 %v326
      %v443 = vunpack.c.h.b16 %v326
      %v444 = vunpack.c.l.b16 %v327
      %v445 = vunpack.c.h.b16 %v327
      %v446 = vunpack.c.l.b16 %v328
      %v447 = vunpack.c.h.b16 %v328
      %v448 = vunpack.c.l.b16 %v329
      %v449 = vunpack.c.h.b16 %v329
      %v450 = vunpack.c.l.b16 %v330
      %v451 = vunpack.c.h.b16 %v330
      %v452 = vunpack.c.l.b16 %v331
      %v453 = vunpack.c.h.b16 %v331
      %v454 = vunpack.c.l.b16 %v332
      %v455 = vunpack.c.h.b16 %v332
      %v456 = vunpack.c.l.b16 %v333
      %v457 = vunpack.c.h.b16 %v333
      %v458 = vunpack.c.l.b16 %v334
      %v459 = vunpack.c.h.b16 %v334
      %v460 = vunpack.c.l.b16 %v335
      %v461 = vunpack.c.h.b16 %v335
      %v462 = vunpack.c.l.b16 %v336
      %v463 = vunpack.c.h.b16 %v336
      %v464 = vunpack.c.l.b16 %v337
      %v465 = vunpack.c.h.b16 %v337
      %v466 = vpack.c.b16 %v404, %v402
      %v467 = vpack.c.b16 %v405, %v403
      %v468 = vpack.c.b16 %v408, %v406
      %v469 = vpack.c.b16 %v409, %v407
      %v470 = vpack.c.b16 %v412, %v410
      %v471 = vpack.c.b16 %v413, %v411
      %v472 = vpack.c.b16 %v416, %v414
      %v473 = vpack.c.b16 %v417, %v415
      %v474 = vpack.c.b16 %v420, %v418
      %v475 = vpack.c.b16 %v421, %v419
      %v476 = vpack.c.b16 %v424, %v422
      %v477 = vpack.c.b16 %v425, %v423
      %v478 = vpack.c.b16 %v428, %v426
      %v479 = vpack.c.b16 %v429, %v427
      %v480 = vpack.c.b16 %v432, %v430
      %v481 = vpack.c.b16 %v433, %v431
      %v482 = vpack.c.b16 %v436, %v434
      %v483 = vpack.c.b16 %v437, %v435
      %v484 = vpack.c.b16 %v440, %v438
      %v485 = vpack.c.b16 %v441, %v439
      %v486 = vpack.c.b16 %v444, %v442
      %v487 = vpack.c.b16 %v445, %v443
      %v488 = vpack.c.b16 %v448, %v446
      %v489 = vpack.c.b16 %v449, %v447
      %v490 = vpack.c.b16 %v452, %v450
      %v491 = vpack.c.b16 %v453, %v451
      %v492 = vpack.c.b16 %v456, %v454
      %v493 = vpack.c.b16 %v457, %v455
      %v494 = vpack.c.b16 %v460, %v458
      %v495 = vpack.c.b16 %v461, %v459
      %v496 = vpack.c.b16 %v464, %v462
      %v497 = vpack.c.b16 %v465, %v463
      %v562 = vunpack.c.l.b16 %v338
      %v563 = vunpack.c.l.b16 %v339
      %v564 = vunpack.c.l.b16 %v340
      %v565 = vunpack.c.l.b16 %v341
      %v566 = vunpack.c.l.b16 %v342
      %v567 = vunpack.c.l.b16 %v343
      %v568 = vunpack.c.l.b16 %v344
      %v569 = vunpack.c.l.b16 %v345
      %v570 = vunpack.c.l.b16 %v346
      %v571 = vunpack.c.l.b16 %v347
      %v572 = vunpack.c.l.b16 %v348
      %v573 = vunpack.c.l.b16 %v349
      %v574 = vunpack.c.l.b16 %v350
      %v575 = vunpack.c.l.b16 %v351
      %v576 = vunpack.c.l.b16 %v352
      %v577 = vunpack.c.l.b16 %v353
      %v578 = vunpack.c.l.b16 %v354
      %v579 = vunpack.c.l.b16 %v355
      %v580 = vunpack.c.l.b16 %v356
      %v581 = vunpack.c.l.b16 %v357
      %v582 = vunpack.c.l.b16 %v358
      %v583 = vunpack.c.l.b16 %v359
      %v584 = vunpack.c.l.b16 %v360
      %v585 = vunpack.c.l.b16 %v361
      %v586 = vunpack.c.l.b16 %v362
      %v587 = vunpack.c.l.b16 %v363
      %v588 = vunpack.c.l.b16 %v364
      %v589 = vunpack.c.l.b16 %v365
      %v590 = vunpack.c.l.b16 %v366
      %v591 = vunpack.c.l.b16 %v367
      %v592 = vunpack.c.l.b16 %v368
      %v593 = vunpack.c.l.b16 %v369
      %v594 = vpack.c.b16 %v563, %v562
      %v595 = vpack.c.b16 %v565, %v564
      %v596 = vpack.c.b16 %v567, %v566
      %v597 = vpack.c.b16 %v569, %v568
      %v598 = vpack.c.b16 %v571, %v570
      %v599 = vpack.c.b16 %v573, %v572
      %v600 = vpack.c.b16 %v575, %v574
      %v601 = vpack.c.b16 %v577, %v576
      %v602 = vpack.c.b16 %v579, %v578
      %v603 = vpack.c.b16 %v581, %v580
      %v604 = vpack.c.b16 %v583, %v582
      %v605 = vpack.c.b16 %v585, %v584
      %v606 = vpack.c.b16 %v587, %v586
      %v607 = vpack.c.b16 %v589, %v588
      %v608 = vpack.c.b16 %v591, %v590
      %v609 = vpack.c.b16 %v593, %v592
      %626 = vmatpush.bf16.msra.mxu0 %v601
      %627 = vmatpush.bf16.msra.mxu0 %v600
      %628 = vmatpush.bf16.msra.mxu0 %v599
      %629 = vmatpush.bf16.msra.mxu0 %v598
      %630 = vmatpush.bf16.msra.mxu0 %v597
      %631 = vmatpush.bf16.msra.mxu0 %v596
      %632 = vmatpush.bf16.msra.mxu0 %v595
      %633 = vmatpush.bf16.msra.mxu0 %v594
      %634 = vmatmul.bf16.gmra.mxu0 %v466
      %v635 = vpop.f32.mrf.mxu0
      %v636 = vadd.f32 0.0, %v635
      %v637 = vpop.f32.mrf.mxu0
      %v638 = vadd.f32 0.0, %v637
      %639 = vmatmul.bf16.gmra.mxu0 %v468
      %v640 = vpop.f32.mrf.mxu0
      %v641 = vadd.f32 0.0, %v640
      %v642 = vpop.f32.mrf.mxu0
      %v643 = vadd.f32 0.0, %v642
      %644 = vmatmul.bf16.gmra.mxu0 %v470
      %v645 = vpop.f32.mrf.mxu0
      %v646 = vadd.f32 0.0, %v645
      %v647 = vpop.f32.mrf.mxu0
      %v648 = vadd.f32 0.0, %v647
      %649 = vmatmul.bf16.gmra.mxu0 %v472
      %v650 = vpop.f32.mrf.mxu0
      %v651 = vadd.f32 0.0, %v650
      %v652 = vpop.f32.mrf.mxu0
      %v653 = vadd.f32 0.0, %v652
      %654 = vmatmul.bf16.gmra.mxu0 %v474
      %v655 = vpop.f32.mrf.mxu0
      %v656 = vadd.f32 0.0, %v655
      %v657 = vpop.f32.mrf.mxu0
      %v658 = vadd.f32 0.0, %v657
      %659 = vmatmul.bf16.gmra.mxu0 %v476
      %v660 = vpop.f32.mrf.mxu0
      %v661 = vadd.f32 0.0, %v660
      %v662 = vpop.f32.mrf.mxu0
      %v663 = vadd.f32 0.0, %v662
      %664 = vmatmul.bf16.gmra.mxu0 %v478
      %v665 = vpop.f32.mrf.mxu0
      %v666 = vadd.f32 0.0, %v665
      %v667 = vpop.f32.mrf.mxu0
      %v668 = vadd.f32 0.0, %v667
      %669 = vmatmul.bf16.gmra.mxu0 %v480
      %v670 = vpop.f32.mrf.mxu0
      %v671 = vadd.f32 0.0, %v670
      %v672 = vpop.f32.mrf.mxu0
      %v673 = vadd.f32 0.0, %v672
      %674 = vmatmul.bf16.gmra.mxu0 %v482
      %v675 = vpop.f32.mrf.mxu0
      %v676 = vadd.f32 0.0, %v675
      %v677 = vpop.f32.mrf.mxu0
      %v678 = vadd.f32 0.0, %v677
      %679 = vmatmul.bf16.gmra.mxu0 %v484
      %v680 = vpop.f32.mrf.mxu0
      %v681 = vadd.f32 0.0, %v680
      %v682 = vpop.f32.mrf.mxu0
      %v683 = vadd.f32 0.0, %v682
      %684 = vmatmul.bf16.gmra.mxu0 %v486
      %v685 = vpop.f32.mrf.mxu0
      %v686 = vadd.f32 0.0, %v685
      %v687 = vpop.f32.mrf.mxu0
      %v688 = vadd.f32 0.0, %v687
      %689 = vmatmul.bf16.gmra.mxu0 %v488
      %v690 = vpop.f32.mrf.mxu0
      %v691 = vadd.f32 0.0, %v690
      %v692 = vpop.f32.mrf.mxu0
      %v693 = vadd.f32 0.0, %v692
      %694 = vmatmul.bf16.gmra.mxu0 %v490
      %v695 = vpop.f32.mrf.mxu0
      %v696 = vadd.f32 0.0, %v695
      %v697 = vpop.f32.mrf.mxu0
      %v698 = vadd.f32 0.0, %v697
      %699 = vmatmul.bf16.gmra.mxu0 %v492
      %v700 = vpop.f32.mrf.mxu0
      %v701 = vadd.f32 0.0, %v700
      %v702 = vpop.f32.mrf.mxu0
      %v703 = vadd.f32 0.0, %v702
      %704 = vmatmul.bf16.gmra.mxu0 %v494
      %v705 = vpop.f32.mrf.mxu0
      %v706 = vadd.f32 0.0, %v705
      %v707 = vpop.f32.mrf.mxu0
      %v708 = vadd.f32 0.0, %v707
      %709 = vmatmul.bf16.gmra.mxu0 %v496
      %v710 = vpop.f32.mrf.mxu0
      %v711 = vadd.f32 0.0, %v710
      %v712 = vpop.f32.mrf.mxu0
      %v713 = vadd.f32 0.0, %v712
      %714 = vdwg.mxu0
      %715 = vmatpush.bf16.msra.mxu0 %v609
      %716 = vmatpush.bf16.msra.mxu0 %v608
      %717 = vmatpush.bf16.msra.mxu0 %v607
      %718 = vmatpush.bf16.msra.mxu0 %v606
      %719 = vmatpush.bf16.msra.mxu0 %v605
      %720 = vmatpush.bf16.msra.mxu0 %v604
      %721 = vmatpush.bf16.msra.mxu0 %v603
      %722 = vmatpush.bf16.msra.mxu0 %v602
      %723 = vmatmul.bf16.gmra.mxu0 %v467
      %v724 = vpop.f32.mrf.mxu0
      %v725 = vadd.f32 %v636, %v724
      %v726 = vpop.f32.mrf.mxu0
      %v727 = vadd.f32 %v638, %v726
      %728 = vmatmul.bf16.gmra.mxu0 %v469
      %v729 = vpop.f32.mrf.mxu0
      %v730 = vadd.f32 %v641, %v729
      %v731 = vpop.f32.mrf.mxu0
      %v732 = vadd.f32 %v643, %v731
      %733 = vmatmul.bf16.gmra.mxu0 %v471
      %v734 = vpop.f32.mrf.mxu0
      %v735 = vadd.f32 %v646, %v734
      %v736 = vpop.f32.mrf.mxu0
      %v737 = vadd.f32 %v648, %v736
      %738 = vmatmul.bf16.gmra.mxu0 %v473
      %v739 = vpop.f32.mrf.mxu0
      %v740 = vadd.f32 %v651, %v739
      %v741 = vpop.f32.mrf.mxu0
      %v742 = vadd.f32 %v653, %v741
      %743 = vmatmul.bf16.gmra.mxu0 %v475
      %v744 = vpop.f32.mrf.mxu0
      %v745 = vadd.f32 %v656, %v744
      %v746 = vpop.f32.mrf.mxu0
      %v747 = vadd.f32 %v658, %v746
      %748 = vmatmul.bf16.gmra.mxu0 %v477
      %v749 = vpop.f32.mrf.mxu0
      %v750 = vadd.f32 %v661, %v749
      %v751 = vpop.f32.mrf.mxu0
      %v752 = vadd.f32 %v663, %v751
      %753 = vmatmul.bf16.gmra.mxu0 %v479
      %v754 = vpop.f32.mrf.mxu0
      %v755 = vadd.f32 %v666, %v754
      %v756 = vpop.f32.mrf.mxu0
      %v757 = vadd.f32 %v668, %v756
      %758 = vmatmul.bf16.gmra.mxu0 %v481
      %v759 = vpop.f32.mrf.mxu0
      %v760 = vadd.f32 %v671, %v759
      %v761 = vpop.f32.mrf.mxu0
      %v762 = vadd.f32 %v673, %v761
      %763 = vmatmul.bf16.gmra.mxu0 %v483
      %v764 = vpop.f32.mrf.mxu0
      %v765 = vadd.f32 %v676, %v764
      %v766 = vpop.f32.mrf.mxu0
      %v767 = vadd.f32 %v678, %v766
      %768 = vmatmul.bf16.gmra.mxu0 %v485
      %v769 = vpop.f32.mrf.mxu0
      %v770 = vadd.f32 %v681, %v769
      %v771 = vpop.f32.mrf.mxu0
      %v772 = vadd.f32 %v683, %v771
      %773 = vmatmul.bf16.gmra.mxu0 %v487
      %v774 = vpop.f32.mrf.mxu0
      %v775 = vadd.f32 %v686, %v774
      %v776 = vpop.f32.mrf.mxu0
      %v777 = vadd.f32 %v688, %v776
      %778 = vmatmul.bf16.gmra.mxu0 %v489
      %v779 = vpop.f32.mrf.mxu0
      %v780 = vadd.f32 %v691, %v779
      %v781 = vpop.f32.mrf.mxu0
      %v782 = vadd.f32 %v693, %v781
      %783 = vmatmul.bf16.gmra.mxu0 %v491
      %v784 = vpop.f32.mrf.mxu0
      %v785 = vadd.f32 %v696, %v784
      %v786 = vpop.f32.mrf.mxu0
      %v787 = vadd.f32 %v698, %v786
      %788 = vmatmul.bf16.gmra.mxu0 %v493
      %v789 = vpop.f32.mrf.mxu0
      %v790 = vadd.f32 %v701, %v789
      %v791 = vpop.f32.mrf.mxu0
      %v792 = vadd.f32 %v703, %v791
      %793 = vmatmul.bf16.gmra.mxu0 %v495
      %v794 = vpop.f32.mrf.mxu0
      %v795 = vadd.f32 %v706, %v794
      %v796 = vpop.f32.mrf.mxu0
      %v797 = vadd.f32 %v708, %v796
      %798 = vmatmul.bf16.gmra.mxu0 %v497
      %v799 = vpop.f32.mrf.mxu0
      %v800 = vadd.f32 %v711, %v799
      %v801 = vpop.f32.mrf.mxu0
      %v802 = vadd.f32 %v713, %v801
      %803 = vdwg.mxu0
      %v804 = vadd.f32 %v274, %v725
      %v805 = vadd.f32 %v275, %v727
      %v806 = vadd.f32 %v276, %v730
      %v807 = vadd.f32 %v277, %v732
      %v808 = vadd.f32 %v278, %v735
      %v809 = vadd.f32 %v279, %v737
      %v810 = vadd.f32 %v280, %v740
      %v811 = vadd.f32 %v281, %v742
      %v812 = vadd.f32 %v282, %v745
      %v813 = vadd.f32 %v283, %v747
      %v814 = vadd.f32 %v284, %v750
      %v815 = vadd.f32 %v285, %v752
      %v816 = vadd.f32 %v286, %v755
      %v817 = vadd.f32 %v287, %v757
      %v818 = vadd.f32 %v288, %v760
      %v819 = vadd.f32 %v289, %v762
      %v820 = vadd.f32 %v290, %v765
      %v821 = vadd.f32 %v291, %v767
      %v822 = vadd.f32 %v292, %v770
      %v823 = vadd.f32 %v293, %v772
      %v824 = vadd.f32 %v294, %v775
      %v825 = vadd.f32 %v295, %v777
      %v826 = vadd.f32 %v296, %v780
      %v827 = vadd.f32 %v297, %v782
      %v828 = vadd.f32 %v298, %v785
      %v829 = vadd.f32 %v299, %v787
      %v830 = vadd.f32 %v300, %v790
      %v831 = vadd.f32 %v301, %v792
      %v832 = vadd.f32 %v302, %v795
      %v833 = vadd.f32 %v303, %v797
      %v834 = vadd.f32 %v304, %v800
      %v835 = vadd.f32 %v305, %v802
      %836 = vst [vmem:[#allocation2] sm:$0xff] %v804
      %837 = vst [vmem:[#allocation2 + $0x8] sm:$0xff] %v805
      %838 = vst [vmem:[#allocation2 + $0x10] sm:$0xff] %v806
      %839 = vst [vmem:[#allocation2 + $0x18] sm:$0xff] %v807
      %840 = vst [vmem:[#allocation2 + $0x20] sm:$0xff] %v808
      %841 = vst [vmem:[#allocation2 + $0x28] sm:$0xff] %v809
      %842 = vst [vmem:[#allocation2 + $0x30] sm:$0xff] %v810
      %843 = vst [vmem:[#allocation2 + $0x38] sm:$0xff] %v811
      %844 = vst [vmem:[#allocation2 + $0x40] sm:$0xff] %v812
      %845 = vst [vmem:[#allocation2 + $0x48] sm:$0xff] %v813
      %846 = vst [vmem:[#allocation2 + $0x50] sm:$0xff] %v814
      %847 = vst [vmem:[#allocation2 + $0x58] sm:$0xff] %v815
      %848 = vst [vmem:[#allocation2 + $0x60] sm:$0xff] %v816
      %849 = vst [vmem:[#allocation2 + $0x68] sm:$0xff] %v817
      %850 = vst [vmem:[#allocation2 + $0x70] sm:$0xff] %v818
      %851 = vst [vmem:[#allocation2 + $0x78] sm:$0xff] %v819
      %852 = vst [vmem:[#allocation2 + $0x80] sm:$0xff] %v820
      %853 = vst [vmem:[#allocation2 + $0x88] sm:$0xff] %v821
      %854 = vst [vmem:[#allocation2 + $0x90] sm:$0xff] %v822
      %855 = vst [vmem:[#allocation2 + $0x98] sm:$0xff] %v823
      %856 = vst [vmem:[#allocation2 + $0xa0] sm:$0xff] %v824
      %857 = vst [vmem:[#allocation2 + $0xa8] sm:$0xff] %v825
      %858 = vst [vmem:[#allocation2 + $0xb0] sm:$0xff] %v826
      %859 = vst [vmem:[#allocation2 + $0xb8] sm:$0xff] %v827
      %860 = vst [vmem:[#allocation2 + $0xc0] sm:$0xff] %v828
      %861 = vst [vmem:[#allocation2 + $0xc8] sm:$0xff] %v829
      %862 = vst [vmem:[#allocation2 + $0xd0] sm:$0xff] %v830
      %863 = vst [vmem:[#allocation2 + $0xd8] sm:$0xff] %v831
      %864 = vst [vmem:[#allocation2 + $0xe0] sm:$0xff] %v832
      %865 = vst [vmem:[#allocation2 + $0xe8] sm:$0xff] %v833
      %866 = vst [vmem:[#allocation2 + $0xf0] sm:$0xff] %v834
      %867 = vst [vmem:[#allocation2 + $0xf8] sm:$0xff] %v835
      // Predicated region
      $region33: #{conv_bn.2} parent=27 // pred_check
        %p868 = pneg %p238
      $region34: #{conv_bn.2} parent=27 // pred_check_branch
        %870 = sbr.rel (%p868) target = $region36
      $region35: #{conv_bn.2} parent=27 // pred_region
        %v871 = vld [vmem:[#allocation2] sm:$0xff]
        %v872 = vld [vmem:[#allocation2 + $0x8] sm:$0xff]
        %v873 = vld [vmem:[#allocation2 + $0x10] sm:$0xff]
        %v874 = vld [vmem:[#allocation2 + $0x18] sm:$0xff]
        %v875 = vld [vmem:[#allocation2 + $0x20] sm:$0xff]
        %v876 = vld [vmem:[#allocation2 + $0x28] sm:$0xff]
        %v877 = vld [vmem:[#allocation2 + $0x30] sm:$0xff]
        %v878 = vld [vmem:[#allocation2 + $0x38] sm:$0xff]
        %v879 = vld [vmem:[#allocation2 + $0x40] sm:$0xff]
        %v880 = vld [vmem:[#allocation2 + $0x48] sm:$0xff]
        %v881 = vld [vmem:[#allocation2 + $0x50] sm:$0xff]
        %v882 = vld [vmem:[#allocation2 + $0x58] sm:$0xff]
        %v883 = vld [vmem:[#allocation2 + $0x60] sm:$0xff]
        %v884 = vld [vmem:[#allocation2 + $0x68] sm:$0xff]
        %v885 = vld [vmem:[#allocation2 + $0x70] sm:$0xff]
        %v886 = vld [vmem:[#allocation2 + $0x78] sm:$0xff]
        %v887 = vld [vmem:[#allocation2 + $0x80] sm:$0xff]
        %v888 = vld [vmem:[#allocation2 + $0x88] sm:$0xff]
        %v889 = vld [vmem:[#allocation2 + $0x90] sm:$0xff]
        %v890 = vld [vmem:[#allocation2 + $0x98] sm:$0xff]
        %v891 = vld [vmem:[#allocation2 + $0xa0] sm:$0xff]
        %v892 = vld [vmem:[#allocation2 + $0xa8] sm:$0xff]
        %v893 = vld [vmem:[#allocation2 + $0xb0] sm:$0xff]
        %v894 = vld [vmem:[#allocation2 + $0xb8] sm:$0xff]
        %v895 = vld [vmem:[#allocation2 + $0xc0] sm:$0xff]
        %v896 = vld [vmem:[#allocation2 + $0xc8] sm:$0xff]
        %v897 = vld [vmem:[#allocation2 + $0xd0] sm:$0xff]
        %v898 = vld [vmem:[#allocation2 + $0xd8] sm:$0xff]
        %v899 = vld [vmem:[#allocation2 + $0xe0] sm:$0xff]
        %v900 = vld [vmem:[#allocation2 + $0xe8] sm:$0xff]
        %v901 = vld [vmem:[#allocation2 + $0xf0] sm:$0xff]
        %v902 = vld [vmem:[#allocation2 + $0xf8] sm:$0xff]
        %v903 = vpack.c.bf16 %v871, %v871
        %v904 = vpack.c.bf16 %v872, %v872
        %v905 = vpack.c.bf16 %v873, %v873
        %v906 = vpack.c.bf16 %v874, %v874
        %v907 = vpack.c.bf16 %v875, %v875
        %v908 = vpack.c.bf16 %v876, %v876
        %v909 = vpack.c.bf16 %v877, %v877
        %v910 = vpack.c.bf16 %v878, %v878
        %v911 = vpack.c.bf16 %v879, %v879
        %v912 = vpack.c.bf16 %v880, %v880
        %v913 = vpack.c.bf16 %v881, %v881
        %v914 = vpack.c.bf16 %v882, %v882
        %v915 = vpack.c.bf16 %v883, %v883
        %v916 = vpack.c.bf16 %v884, %v884
        %v917 = vpack.c.bf16 %v885, %v885
        %v918 = vpack.c.bf16 %v886, %v886
        %v919 = vpack.c.bf16 %v887, %v887
        %v920 = vpack.c.bf16 %v888, %v888
        %v921 = vpack.c.bf16 %v889, %v889
        %v922 = vpack.c.bf16 %v890, %v890
        %v923 = vpack.c.bf16 %v891, %v891
        %v924 = vpack.c.bf16 %v892, %v892
        %v925 = vpack.c.bf16 %v893, %v893
        %v926 = vpack.c.bf16 %v894, %v894
        %v927 = vpack.c.bf16 %v895, %v895
        %v928 = vpack.c.bf16 %v896, %v896
        %v929 = vpack.c.bf16 %v897, %v897
        %v930 = vpack.c.bf16 %v898, %v898
        %v931 = vpack.c.bf16 %v899, %v899
        %v932 = vpack.c.bf16 %v900, %v900
        %v933 = vpack.c.bf16 %v901, %v901
        %v934 = vpack.c.bf16 %v902, %v902
        %935 = vst [vmem:[%s232] sm:$0xf] %v903
        %936 = vst [vmem:[%s232 + $0x4] sm:$0xf] %v904
        %937 = vst [vmem:[%s232 + $0x8] sm:$0xf] %v905
        %938 = vst [vmem:[%s232 + $0xc] sm:$0xf] %v906
        %939 = vst [vmem:[%s232 + $0x10] sm:$0xf] %v907
        %940 = vst [vmem:[%s232 + $0x14] sm:$0xf] %v908
        %941 = vst [vmem:[%s232 + $0x18] sm:$0xf] %v909
        %942 = vst [vmem:[%s232 + $0x1c] sm:$0xf] %v910
        %943 = vst [vmem:[%s232 + $0x20] sm:$0xf] %v911
        %944 = vst [vmem:[%s232 + $0x24] sm:$0xf] %v912
        %945 = vst [vmem:[%s232 + $0x28] sm:$0xf] %v913
        %946 = vst [vmem:[%s232 + $0x2c] sm:$0xf] %v914
        %947 = vst [vmem:[%s232 + $0x30] sm:$0xf] %v915
        %948 = vst [vmem:[%s232 + $0x34] sm:$0xf] %v916
        %949 = vst [vmem:[%s232 + $0x38] sm:$0xf] %v917
        %950 = vst [vmem:[%s232 + $0x3c] sm:$0xf] %v918
        %951 = vst [vmem:[%s232 + $0x40] sm:$0xf] %v919
        %952 = vst [vmem:[%s232 + $0x44] sm:$0xf] %v920
        %953 = vst [vmem:[%s232 + $0x48] sm:$0xf] %v921
        %954 = vst [vmem:[%s232 + $0x4c] sm:$0xf] %v922
        %955 = vst [vmem:[%s232 + $0x50] sm:$0xf] %v923
        %956 = vst [vmem:[%s232 + $0x54] sm:$0xf] %v924
        %957 = vst [vmem:[%s232 + $0x58] sm:$0xf] %v925
        %958 = vst [vmem:[%s232 + $0x5c] sm:$0xf] %v926
        %959 = vst [vmem:[%s232 + $0x60] sm:$0xf] %v927
        %960 = vst [vmem:[%s232 + $0x64] sm:$0xf] %v928
        %961 = vst [vmem:[%s232 + $0x68] sm:$0xf] %v929
        %962 = vst [vmem:[%s232 + $0x6c] sm:$0xf] %v930
        %963 = vst [vmem:[%s232 + $0x70] sm:$0xf] %v931
        %964 = vst [vmem:[%s232 + $0x74] sm:$0xf] %v932
        %965 = vst [vmem:[%s232 + $0x78] sm:$0xf] %v933
        %966 = vst [vmem:[%s232 + $0x7c] sm:$0xf] %v934
        %v967 = vadd.f32 %v871, %v872
        %v968 = vadd.f32 %v967, %v873
        %v969 = vadd.f32 %v968, %v874
        %v970 = vadd.f32 %v969, %v875
        %v971 = vadd.f32 %v970, %v876
        %v972 = vadd.f32 %v971, %v877
        %v973 = vadd.f32 %v972, %v878
        %v974 = vadd.f32 %v973, %v879
        %v975 = vadd.f32 %v974, %v880
        %v976 = vadd.f32 %v975, %v881
        %v977 = vadd.f32 %v976, %v882
        %v978 = vadd.f32 %v977, %v883
        %v979 = vadd.f32 %v978, %v884
        %v980 = vadd.f32 %v979, %v885
        %v981 = vadd.f32 %v980, %v886
        %v982 = vadd.f32 %v981, %v887
        %v983 = vadd.f32 %v982, %v888
        %v984 = vadd.f32 %v983, %v889
        %v985 = vadd.f32 %v984, %v890
        %v986 = vadd.f32 %v985, %v891
        %v987 = vadd.f32 %v986, %v892
        %v988 = vadd.f32 %v987, %v893
        %v989 = vadd.f32 %v988, %v894
        %v990 = vadd.f32 %v989, %v895
        %v991 = vadd.f32 %v990, %v896
        %v992 = vadd.f32 %v991, %v897
        %v993 = vadd.f32 %v992, %v898
        %v994 = vadd.f32 %v993, %v899
        %v995 = vadd.f32 %v994, %v900
        %v996 = vadd.f32 %v995, %v901
        %v997 = vadd.f32 %v996, %v902
        %v998 = vrot.slane %v997, 4
        %v999 = vadd.f32 %v997, %v998
        %v1000 = vrot.slane %v999, 2
        %v1001 = vadd.f32 %v999, %v1000
        %v1002 = vrot.slane %v1001, 1
        %v1003 = vadd.f32 %v1001, %v1002
        %1004 = vst [vmem:[%s237] sm:$0x1] %v1003
        %v1005 = vmul.f32 %v871, %v871
        %v1006 = vmul.f32 %v872, %v872
        %v1007 = vmul.f32 %v873, %v873
        %v1008 = vmul.f32 %v874, %v874
        %v1009 = vmul.f32 %v875, %v875
        %v1010 = vmul.f32 %v876, %v876
        %v1011 = vmul.f32 %v877, %v877
        %v1012 = vmul.f32 %v878, %v878
        %v1013 = vmul.f32 %v879, %v879
        %v1014 = vmul.f32 %v880, %v880
        %v1015 = vmul.f32 %v881, %v881
        %v1016 = vmul.f32 %v882, %v882
        %v1017 = vmul.f32 %v883, %v883
        %v1018 = vmul.f32 %v884, %v884
        %v1019 = vmul.f32 %v885, %v885
        %v1020 = vmul.f32 %v886, %v886
        %v1021 = vmul.f32 %v887, %v887
        %v1022 = vmul.f32 %v888, %v888
        %v1023 = vmul.f32 %v889, %v889
        %v1024 = vmul.f32 %v890, %v890
        %v1025 = vmul.f32 %v891, %v891
        %v1026 = vmul.f32 %v892, %v892
        %v1027 = vmul.f32 %v893, %v893
        %v1028 = vmul.f32 %v894, %v894
        %v1029 = vmul.f32 %v895, %v895
        %v1030 = vmul.f32 %v896, %v896
        %v1031 = vmul.f32 %v897, %v897
        %v1032 = vmul.f32 %v898, %v898
        %v1033 = vmul.f32 %v899, %v899
        %v1034 = vmul.f32 %v900, %v900
        %v1035 = vmul.f32 %v901, %v901
        %v1036 = vmul.f32 %v902, %v902
        %v1037 = vadd.f32 %v1005, %v1006
        %v1038 = vadd.f32 %v1037, %v1007
        %v1039 = vadd.f32 %v1038, %v1008
        %v1040 = vadd.f32 %v1039, %v1009
        %v1041 = vadd.f32 %v1040, %v1010
        %v1042 = vadd.f32 %v1041, %v1011
        %v1043 = vadd.f32 %v1042, %v1012
        %v1044 = vadd.f32 %v1043, %v1013
        %v1045 = vadd.f32 %v1044, %v1014
        %v1046 = vadd.f32 %v1045, %v1015
        %v1047 = vadd.f32 %v1046, %v1016
        %v1048 = vadd.f32 %v1047, %v1017
        %v1049 = vadd.f32 %v1048, %v1018
        %v1050 = vadd.f32 %v1049, %v1019
        %v1051 = vadd.f32 %v1050, %v1020
        %v1052 = vadd.f32 %v1051, %v1021
        %v1053 = vadd.f32 %v1052, %v1022
        %v1054 = vadd.f32 %v1053, %v1023
        %v1055 = vadd.f32 %v1054, %v1024
        %v1056 = vadd.f32 %v1055, %v1025
        %v1057 = vadd.f32 %v1056, %v1026
        %v1058 = vadd.f32 %v1057, %v1027
        %v1059 = vadd.f32 %v1058, %v1028
        %v1060 = vadd.f32 %v1059, %v1029
        %v1061 = vadd.f32 %v1060, %v1030
        %v1062 = vadd.f32 %v1061, %v1031
        %v1063 = vadd.f32 %v1062, %v1032
        %v1064 = vadd.f32 %v1063, %v1033
        %v1065 = vadd.f32 %v1064, %v1034
        %v1066 = vadd.f32 %v1065, %v1035
        %v1067 = vadd.f32 %v1066, %v1036
        %v1068 = vrot.slane %v1067, 4
        %v1069 = vadd.f32 %v1067, %v1068
        %v1070 = vrot.slane %v1069, 2
        %v1071 = vadd.f32 %v1069, %v1070
        %v1072 = vrot.slane %v1071, 1
        %v1073 = vadd.f32 %v1071, %v1072
        %1074 = vst [vmem:[%s237 + $0x1] sm:$0x1] %v1073
      $region36: #{conv_bn.2} parent=27 // pred_fallthru
        _
      %s1075 = smul.u32 32, %s19
      %p1076 = scmp.lt.s32.totalorder %s1075, 63
      %s1077 = scalar_select %p1076, %s1075, 63
      %s1078 = smul.addr %s1077, 4
      %s1079 = scalar_lea.vmem %s2, %s1078
      %p1080 = scmp.lt.s32.totalorder %s19, 1
      %s1081 = scalar_select %p1080, %s19, 1
      %s1082 = smul.addr %s1081, 2
      %s1083 = scalar_lea.vmem %s3, %s1082
      // Predicated region
      $region37: #{conv_bn.2} parent=27 // pred_check
        %p1084 = pneg %p99
      $region38: #{conv_bn.2} parent=27 // pred_check_branch
        %1086 = sbr.rel (%p1084) target = $region40
      $region39: #{conv_bn.2} parent=27 // pred_region
        %s1087 = smul.u32 32, %s19
      $region40: #{conv_bn.2} parent=27 // pred_fallthru
        _
      // Predicated region
      $region41: #{conv_bn.2} parent=27 // pred_check
        %p1088 = pneg %p125
      $region42: #{conv_bn.2} parent=27 // pred_check_branch
        %1090 = sbr.rel (%p1088) target = $region44
      $region43: #{conv_bn.2} parent=27 // pred_region
        _
      $region44: #{conv_bn.2} parent=27 // pred_fallthru
        _
    $region28: #{conv_bn.2} parent=5 // pred_fallthru
      _
    %p1091 = scmp.le.s32.totalorder 2, %s10
    // Predicated region
    $region45: #{conv_bn.2} parent=5 // pred_check
      %p1092 = pneg %p1091
    $region46: #{conv_bn.2} parent=5 // pred_check_branch
      %1094 = sbr.rel (%p1092) target = $region48
    $region47: #{conv_bn.2} parent=5 // pred_region
      %s1095 = ssub.s32 %s10, 2
      // Predicated region
      $region49: #{conv_bn.2} parent=47 // pred_check
        %p1096 = pneg %p105
      $region50: #{conv_bn.2} parent=47 // pred_check_branch
        %1098 = sbr.rel (%p1096) target = $region52
      $region51: #{conv_bn.2} parent=47 // pred_region
        %s1099 = smul.u32 32, %s21
        %p1100 = scmp.lt.s32.totalorder %s1099, 63
        %s1101 = scalar_select %p1100, %s1099, 63
        %s1102 = smul.addr %s1101, 4
        %s1103 = scalar_lea.vmem %s2, %s1102
      $region52: #{conv_bn.2} parent=47 // pred_fallthru
        _
      // Predicated region
      $region53: #{conv_bn.2} parent=47 // pred_check
        %p1104 = pneg %p131
      $region54: #{conv_bn.2} parent=47 // pred_check_branch
        %1106 = sbr.rel (%p1104) target = $region56
      $region55: #{conv_bn.2} parent=47 // pred_region
        %p1107 = scmp.lt.s32.totalorder %s21, 1
        %s1108 = scalar_select %p1107, %s21, 1
        %s1109 = smul.addr %s1108, 2
        %s1110 = scalar_lea.vmem %s3, %s1109
      $region56: #{conv_bn.2} parent=47 // pred_fallthru
        _
    $region48: #{conv_bn.2} parent=5 // pred_fallthru
      _
  $region6: #{conv_bn.2} parent=0 // loop_footer
    %s14 = sadd.s32 1, %s10
  $region7: #{conv_bn.2} parent=0 // loop_footer_branch
    %9 = sbr.rel target = $region3
  $region8: #{conv_bn.2} parent=0 // loop_exit
    _

</llo_original>
